<compile_context>
chip_gen: v7x
topology: tpu7x:2x2x1
jax: 0.10.0
libtpu: 0.0.40
codegen_flags: <defaults>
</compile_context>

<pallas_src>
import numpy as np
import jax
import jax.numpy as jnp
from jax.experimental import pallas as pl
from jax.experimental.pallas import tpu as pltpu

N_ATOMS = 51
Vmax = 10
Vmin = -10
DELTA_Z = (Vmax - Vmin) / (N_ATOMS - 1)

HIDDEN = 256            # H
ATOMS_PAD = 64          # 51 -> 64 so each action's block is lane friendly
LANES = 128
SUBLANES = 8


def _round_up(x, m):
    return (x + m - 1) // m * m


def _cdiv(a, b):
    return (a + b - 1) // b


# --------------------------------------------------------------------------- #
# Kernel
# --------------------------------------------------------------------------- #
def _rainbow_kernel(x_ref, w1_ref, b1_ref, w2_ref, b2_ref, out_ref):
    """Per batch tile: out = relu(x @ W1 + b1) @ W2 + b2.

    The dueling combine is pre-folded into W2/b2, so the epilogue is only the
    cast + lane-dense store."""
    h = jnp.dot(x_ref[...], w1_ref[...], preferred_element_type=jnp.float32)
    h = jnp.maximum(h + b1_ref[...], 0.0).astype(jnp.bfloat16)          # (TB, 2H)
    out = jnp.dot(h, w2_ref[...], preferred_element_type=jnp.float32) + b2_ref[...]
    out_ref[...] = out.astype(out_ref.dtype)                            # (TB, A*64)


# --------------------------------------------------------------------------- #
# Wrapper
# --------------------------------------------------------------------------- #
def _pick_batch_tiling(batch, batch_tile):
    """Pad the batch only to a multiple of 8 and pick TB so that
    (a) the grid has >= 2 steps whenever the 8-padded batch has >= 16 rows
        (two v7x TensorCores + DMA/compute overlap), and
    (b) TB <= batch_tile so large batches get 3+ pipeline steps."""
    p8 = _round_up(batch, SUBLANES)
    if p8 < 2 * SUBLANES:
        return p8, p8                                   # single tiny tile
    n_tiles = max(2, _cdiv(p8, batch_tile))
    tb = _round_up(_cdiv(p8, n_tiles), SUBLANES)
    pb = _round_up(p8, tb)                              # at most TB-8 extra rows
    return tb, pb


def rainbow_forward(x, params, n_actions, *, batch_tile=256,
                    out_dtype=jnp.float32, return_padded=False):
    """RainbowDQN forward.  Returns (B, n_actions, N_ATOMS) dueling logits.
    With return_padded=True returns the (B, n_actions, ATOMS_PAD) tensor
    (atoms 51..63 are exactly zero), skipping the extra XLA slice pass."""
    w1, b1, w2, b2 = params
    A = n_actions
    P = ATOMS_PAD
    H2 = 2 * HIDDEN

    B = x.shape[0]
    x_flat = x.reshape(B, -1)
    D = x_flat.shape[1]
    D_pad = w1.shape[0]
    assert D <= D_pad and D_pad % LANES == 0, "params built for a different input_dim"

    TB, pB = _pick_batch_tiling(B, batch_tile)

    # Lane-dense, zero-padded x tile (padded feature cols hit zero W1 rows).
    x_pad = jnp.zeros((pB, D_pad), jnp.bfloat16)
    x_pad = x_pad.at[:B, :D].set(x_flat.astype(jnp.bfloat16))

    grid = (pB // TB,)
    out_bytes = np.dtype(out_dtype).itemsize

    # VMEM budget: x & out are double-buffered across the grid; the weights are
    # grid-invariant (and requested single-buffered).
    w_bytes = D_pad * H2 * 2 + H2 * 4 + H2 * A * P * 2 + A * P * 4
    vmem_need = (2 * TB * D_pad * 2                  # x, bf16, double-buffered
                 + 2 * TB * A * P * out_bytes        # out, double-buffered
                 + w_bytes
                 + 2 * TB * H2 * 4)                  # hidden intermediates headroom
    vmem_limit = int(min(max(vmem_need + (4 << 20), 32 << 20), 64 << 20))

    cost = pl.CostEstimate(
        flops=2 * pB * (D_pad * H2 + H2 * A * P),
        transcendentals=0,
        bytes_accessed=int(pB * D_pad * 2 + pB * A * P * out_bytes + w_bytes),
    )

    def build_call(single_buffer_weights):
        def w_spec(shape):
            if single_buffer_weights:
                return pl.BlockSpec(shape, lambda i: (0, 0),
                                    pipeline_mode=pl.Buffered(1))
            return pl.BlockSpec(shape, lambda i: (0, 0))

        return pl.pallas_call(
            _rainbow_kernel,
            out_shape=jax.ShapeDtypeStruct((pB, A * P), out_dtype),
            grid=grid,
            in_specs=[
                pl.BlockSpec((TB, D_pad), lambda i: (i, 0)),   # x: batch-tiled
                w_spec((D_pad, H2)),                           # fused W1
                w_spec((1, H2)),                               # fused b1
                w_spec((H2, A * P)),                           # folded (dueling) W2
                w_spec((1, A * P)),                            # folded (dueling) b2
            ],
            out_specs=pl.BlockSpec((TB, A * P), lambda i: (i, 0)),
            compiler_params=pltpu.CompilerParams(
                dimension_semantics=("parallel",),
                vmem_limit_bytes=vmem_limit),
            cost_estimate=cost,
        )

    try:
        out_flat = build_call(True)(x_pad, w1, b1, w2, b2)
    except Exception:
        # Fallback if pipeline_mode=pl.Buffered(1) is rejected by this JAX build.
        out_flat = build_call(False)(x_pad, w1, b1, w2, b2)

    out = out_flat[:B].reshape(B, A, P)
    if return_padded:
        return out
    return out[..., :N_ATOMS]


# --------------------------------------------------------------------------- #
# Parameters
# --------------------------------------------------------------------------- #
def make_noisy_linear(key, in_f, out_f, sigma_init=0.017):
    """Deterministic NoisyLinear: w_eff = w_mu + sigma * eps (fixed draw)."""
    k_w, k_b, k_ew, k_eb = jax.random.split(key, 4)
    bound = 1.0 / np.sqrt(in_f)
    w_mu = jax.random.uniform(k_w, (out_f, in_f), jnp.float32, -bound, bound)
    b_mu = jax.random.uniform(k_b, (out_f,), jnp.float32, -bound, bound)
    eps_w = jax.random.normal(k_ew, (out_f, in_f), jnp.float32)
    eps_b = jax.random.normal(k_eb, (out_f,), jnp.float32)
    w_eff = (w_mu + sigma_init * eps_w).T            # stored (in, out)
    b_eff = b_mu + sigma_init * eps_b                # (out,)
    return w_eff, b_eff


def init_raw_params(key, input_dim, n_actions):
    """Raw f32 NoisyLinear parameters for both streams (PyTorch layout)."""
    k1, k2, k3, k4 = jax.random.split(key, 4)
    w1v, b1v = make_noisy_linear(k1, input_dim, HIDDEN)
    w2v, b2v = make_noisy_linear(k2, HIDDEN, N_ATOMS)
    w1a, b1a = make_noisy_linear(k3, input_dim, HIDDEN)
    w2a, b2a = make_noisy_linear(k4, HIDDEN, n_actions * N_ATOMS)
    return (w1v, b1v), (w2v, b2v), (w1a, b1a), (w2a, b2a)


def build_kernel_params(raw_params, input_dim, n_actions):
    """Fold the two streams + dueling combine into two bf16 matmuls."""
    (w1v, b1v), (w2v, b2v), (w1a, b1a), (w2a, b2a) = raw_params
    A, P, H = n_actions, ATOMS_PAD, HIDDEN
    D_pad = _round_up(input_dim, LANES)

    # Fused first layer [value | advantage]: (D_pad, 2H).  Padded rows are zero.
    w1 = jnp.zeros((D_pad, 2 * H), jnp.float32)
    w1 = w1.at[:input_dim, :H].set(w1v).at[:input_dim, H:].set(w1a)
    w1 = w1.astype(jnp.bfloat16)
    b1 = jnp.concatenate([b1v, b1a]).reshape(1, 2 * H)               # f32

    # Dueling combine is linear -> fold into the second layer.
    w2a_r = w2a.reshape(H, A, N_ATOMS)
    w2a_c = w2a_r - w2a_r.mean(axis=1, keepdims=True)
    b2a_r = b2a.reshape(A, N_ATOMS)
    b2a_c = b2a_r - b2a_r.mean(axis=0, keepdims=True)

    w2 = jnp.zeros((2 * H, A, P), jnp.float32)
    w2 = w2.at[:H, :, :N_ATOMS].set(jnp.broadcast_to(w2v[:, None, :], (H, A, N_ATOMS)))
    w2 = w2.at[H:, :, :N_ATOMS].set(w2a_c)
    w2 = w2.reshape(2 * H, A * P).astype(jnp.bfloat16)

    b2 = jnp.zeros((A, P), jnp.float32)
    b2 = b2.at[:, :N_ATOMS].set(b2v[None, :] + b2a_c)
    b2 = b2.reshape(1, A * P)

    return w1, b1, w2, b2


# --------------------------------------------------------------------------- #
# References
# --------------------------------------------------------------------------- #
def reference_mirror(x, kernel_params, n_actions):
    """Pure-JAX mirror of the kernel's exact numerics (folded bf16 params,
    f32 accumulation) for a tight check."""
    w1, b1, w2, b2 = kernel_params
    B = x.shape[0]
    x_flat = x.reshape(B, -1)
    D_pad = w1.shape[0]
    xp = jnp.zeros((B, D_pad), jnp.bfloat16).at[:, :x_flat.shape[1]].set(
        x_flat.astype(jnp.bfloat16))
    h = jnp.maximum(jnp.dot(xp, w1, preferred_element_type=jnp.float32) + b1, 0.0)
    h = h.astype(jnp.bfloat16)
    out = jnp.dot(h, w2, preferred_element_type=jnp.float32) + b2
    return out.reshape(B, n_actions, ATOMS_PAD)[..., :N_ATOMS]


def reference_f32(x, raw_params, n_actions):
    """PyTorch RainbowDQN.forward semantics in pure f32 (unfolded params)."""
    (w1v, b1v), (w2v, b2v), (w1a, b1a), (w2a, b2a) = raw_params
    B = x.shape[0]
    fx = x.reshape(B, -1).astype(jnp.float32)
    hv = jnp.maximum(fx @ w1v + b1v, 0.0)
    ha = jnp.maximum(fx @ w1a + b1a, 0.0)
    val = (hv @ w2v + b2v).reshape(B, 1, N_ATOMS)
    adv = (ha @ w2a + b2a).reshape(B, n_actions, N_ATOMS)
    return val + (adv - adv.mean(axis=1, keepdims=True))


if __name__ == "__main__":
    key = jax.random.PRNGKey(0)
    k_param, k_x, k_x2 = jax.random.split(key, 3)

    INPUT_DIM = 32      # input_shape[0]
    N_ACTIONS = 4
    BATCH = 2

    raw = init_raw_params(k_param, INPUT_DIM, N_ACTIONS)
    params = build_kernel_params(raw, INPUT_DIM, N_ACTIONS)

    x = jax.random.normal(k_x, (BATCH, INPUT_DIM), jnp.float32)
    out = jax.block_until_ready(rainbow_forward(x, params, N_ACTIONS))
    assert out.shape == (BATCH, N_ACTIONS, N_ATOMS)

    # Tight check: identical folded params / bf16+f32 numerics.
    np.testing.assert_allclose(np.asarray(out),
                               np.asarray(reference_mirror(x, params, N_ACTIONS)),
                               rtol=2e-3, atol=2e-3)
    # Loose check: the true f32 dueling forward with the raw (unfolded) params;
    # tolerance covers bf16 weight/activation quantization.
    np.testing.assert_allclose(np.asarray(out),
                               np.asarray(reference_f32(x, raw, N_ACTIONS)),
                               rtol=2e-2, atol=2e-2)

    # Exercise the multi-tile / padded-batch path (grid >= 2 steps).
    x2 = jax.random.normal(k_x2, (40, INPUT_DIM), jnp.float32)
    out2 = jax.block_until_ready(rainbow_forward(x2, params, N_ACTIONS))
    assert out2.shape == (40, N_ACTIONS, N_ATOMS)
    np.testing.assert_allclose(np.asarray(out2),
                               np.asarray(reference_mirror(x2, params, N_ACTIONS)),
                               rtol=2e-3, atol=2e-3)

    print("KERNEL_OK")
</pallas_src>

<mosaic_0001>
module attributes {stable_mosaic.version = 11 : i64} {
  func.func @_rainbow_kernel(%arg0: i32, %arg1: memref<8x128xbf16, #tpu.memory_space<vmem>>, %arg2: memref<128x512xbf16, #tpu.memory_space<vmem>>, %arg3: memref<1x512xf32, #tpu.memory_space<vmem>>, %arg4: memref<512x256xbf16, #tpu.memory_space<vmem>>, %arg5: memref<1x256xf32, #tpu.memory_space<vmem>>, %arg6: memref<8x256xf32, #tpu.memory_space<vmem>>) attributes {dimension_semantics = [#tpu.dimension_semantics<parallel>], iteration_bounds = array<i64: 1>, scalar_prefetch = 0 : i64, scratch_operands = 0 : i64, tpu.core_type = #tpu.core_type<tc>, window_params = [{transform_indices = @transform_0, window_bounds = array<i64: 8, 128>}, {pipeline_mode = #tpu.pipeline_mode<synchronous>, transform_indices = @transform_1, window_bounds = array<i64: 128, 512>}, {pipeline_mode = #tpu.pipeline_mode<synchronous>, transform_indices = @transform_2, window_bounds = array<i64: 1, 512>}, {pipeline_mode = #tpu.pipeline_mode<synchronous>, transform_indices = @transform_3, window_bounds = array<i64: 512, 256>}, {pipeline_mode = #tpu.pipeline_mode<synchronous>, transform_indices = @transform_4, window_bounds = array<i64: 1, 256>}, {transform_indices = @transform_5, window_bounds = array<i64: 8, 256>}]} {
    %c0 = arith.constant 0 : index
    %c0_0 = arith.constant 0 : index
    %0 = vector.load %arg1[%c0, %c0_0] : memref<8x128xbf16, #tpu.memory_space<vmem>>, vector<8x128xbf16>
    %c0_1 = arith.constant 0 : index
    %c0_2 = arith.constant 0 : index
    %1 = vector.load %arg2[%c0_1, %c0_2] : memref<128x512xbf16, #tpu.memory_space<vmem>>, vector<128x512xbf16>
    %cst = arith.constant dense<0.000000e+00> : vector<8x512xf32>
    %2 = tpu.matmul %0, %1, %cst {dimension_numbers = #tpu.dot_dimension_numbers<[1], [0], [0], [1], [0, 0, 1, 1], [], []>} : vector<8x128xbf16>, vector<128x512xbf16>, vector<8x512xf32> -> vector<8x512xf32>
    %c0_3 = arith.constant 0 : index
    %c0_4 = arith.constant 0 : index
    %3 = vector.load %arg3[%c0_3, %c0_4] : memref<1x512xf32, #tpu.memory_space<vmem>>, vector<1x512xf32>
    %4 = vector.broadcast %3 : vector<1x512xf32> to vector<8x512xf32>
    %5 = arith.addf %2, %4 : vector<8x512xf32>
    %cst_5 = arith.constant 0.000000e+00 : f32
    %6 = vector.broadcast %cst_5 : f32 to vector<8x512xf32>
    %7 = arith.maximumf %5, %6 : vector<8x512xf32>
    %8 = arith.truncf %7 : vector<8x512xf32> to vector<8x512xbf16>
    %c0_6 = arith.constant 0 : index
    %c0_7 = arith.constant 0 : index
    %9 = vector.load %arg4[%c0_6, %c0_7] : memref<512x256xbf16, #tpu.memory_space<vmem>>, vector<512x256xbf16>
    %cst_8 = arith.constant dense<0.000000e+00> : vector<8x256xf32>
    %10 = tpu.matmul %8, %9, %cst_8 {dimension_numbers = #tpu.dot_dimension_numbers<[1], [0], [0], [1], [0, 0, 1, 1], [], []>} : vector<8x512xbf16>, vector<512x256xbf16>, vector<8x256xf32> -> vector<8x256xf32>
    %c0_9 = arith.constant 0 : index
    %c0_10 = arith.constant 0 : index
    %11 = vector.load %arg5[%c0_9, %c0_10] : memref<1x256xf32, #tpu.memory_space<vmem>>, vector<1x256xf32>
    %12 = vector.broadcast %11 : vector<1x256xf32> to vector<8x256xf32>
    %13 = arith.addf %10, %12 : vector<8x256xf32>
    %c0_11 = arith.constant 0 : index
    %c0_12 = arith.constant 0 : index
    %14 = vector.load %arg6[%c0_11, %c0_12] : memref<8x256xf32, #tpu.memory_space<vmem>>, vector<8x256xf32>
    tpu.vector_store %arg6[%c0_11, %c0_12], %13 {strides = array<i32>} : memref<8x256xf32, #tpu.memory_space<vmem>>, vector<8x256xf32>,
    return
  }
  func.func @transform_0(%arg0: i32) -> (i32, i32) {
    %c0_i32 = arith.constant 0 : i32
    %c0_i32_0 = arith.constant 0 : i32
    return %arg0, %c0_i32 : i32, i32
  }
  func.func @transform_1(%arg0: i32) -> (i32, i32) {
    %c0_i32 = arith.constant 0 : i32
    %c0_i32_0 = arith.constant 0 : i32
    %c0_i32_1 = arith.constant 0 : i32
    return %c0_i32, %c0_i32_0 : i32, i32
  }
  func.func @transform_2(%arg0: i32) -> (i32, i32) {
    %c0_i32 = arith.constant 0 : i32
    %c0_i32_0 = arith.constant 0 : i32
    %c0_i32_1 = arith.constant 0 : i32
    return %c0_i32, %c0_i32_0 : i32, i32
  }
  func.func @transform_3(%arg0: i32) -> (i32, i32) {
    %c0_i32 = arith.constant 0 : i32
    %c0_i32_0 = arith.constant 0 : i32
    %c0_i32_1 = arith.constant 0 : i32
    return %c0_i32, %c0_i32_0 : i32, i32
  }
  func.func @transform_4(%arg0: i32) -> (i32, i32) {
    %c0_i32 = arith.constant 0 : i32
    %c0_i32_0 = arith.constant 0 : i32
    %c0_i32_1 = arith.constant 0 : i32
    return %c0_i32, %c0_i32_0 : i32, i32
  }
  func.func @transform_5(%arg0: i32) -> (i32, i32) {
    %c0_i32 = arith.constant 0 : i32
    %c0_i32_0 = arith.constant 0 : i32
    return %arg0, %c0_i32 : i32, i32
  }
}

module attributes {stable_mosaic.version = 11 : i64} {
  func.func @_rainbow_kernel(%arg0: i32, %arg1: memref<8x128xbf16, #tpu.memory_space<vmem>>, %arg2: memref<128x512xbf16, #tpu.memory_space<vmem>>, %arg3: memref<1x512xf32, #tpu.memory_space<vmem>>, %arg4: memref<512x256xbf16, #tpu.memory_space<vmem>>, %arg5: memref<1x256xf32, #tpu.memory_space<vmem>>, %arg6: memref<8x256xf32, #tpu.memory_space<vmem>>) attributes {dimension_semantics = [#tpu.dimension_semantics<parallel>], iteration_bounds = array<i64: 1>, scalar_prefetch = 0 : i64, scratch_operands = 0 : i64, tpu.core_type = #tpu.core_type<tc>, window_params = [{transform_indices = @transform_0, window_bounds = array<i64: 8, 128>}, {pipeline_mode = #tpu.pipeline_mode<synchronous>, transform_indices = @transform_1, window_bounds = array<i64: 128, 512>}, {pipeline_mode = #tpu.pipeline_mode<synchronous>, transform_indices = @transform_2, window_bounds = array<i64: 1, 512>}, {pipeline_mode = #tpu.pipeline_mode<synchronous>, transform_indices = @transform_3, window_bounds = array<i64: 512, 256>}, {pipeline_mode = #tpu.pipeline_mode<synchronous>, transform_indices = @transform_4, window_bounds = array<i64: 1, 256>}, {transform_indices = @transform_5, window_bounds = array<i64: 8, 256>}]} {
    %c0 = arith.constant 0 : index
    %c0_0 = arith.constant 0 : index
    %0 = vector.load %arg1[%c0, %c0_0] : memref<8x128xbf16, #tpu.memory_space<vmem>>, vector<8x128xbf16>
    %c0_1 = arith.constant 0 : index
    %c0_2 = arith.constant 0 : index
    %1 = vector.load %arg2[%c0_1, %c0_2] : memref<128x512xbf16, #tpu.memory_space<vmem>>, vector<128x512xbf16>
    %cst = arith.constant dense<0.000000e+00> : vector<8x512xf32>
    %2 = tpu.matmul %0, %1, %cst {dimension_numbers = #tpu.dot_dimension_numbers<[1], [0], [0], [1], [0, 0, 1, 1], [], []>} : vector<8x128xbf16>, vector<128x512xbf16>, vector<8x512xf32> -> vector<8x512xf32>
    %c0_3 = arith.constant 0 : index
    %c0_4 = arith.constant 0 : index
    %3 = vector.load %arg3[%c0_3, %c0_4] : memref<1x512xf32, #tpu.memory_space<vmem>>, vector<1x512xf32>
    %4 = vector.broadcast %3 : vector<1x512xf32> to vector<8x512xf32>
    %5 = arith.addf %2, %4 : vector<8x512xf32>
    %cst_5 = arith.constant 0.000000e+00 : f32
    %6 = vector.broadcast %cst_5 : f32 to vector<8x512xf32>
    %7 = arith.maximumf %5, %6 : vector<8x512xf32>
    %8 = arith.truncf %7 : vector<8x512xf32> to vector<8x512xbf16>
    %c0_6 = arith.constant 0 : index
    %c0_7 = arith.constant 0 : index
    %9 = vector.load %arg4[%c0_6, %c0_7] : memref<512x256xbf16, #tpu.memory_space<vmem>>, vector<512x256xbf16>
    %cst_8 = arith.constant dense<0.000000e+00> : vector<8x256xf32>
    %10 = tpu.matmul %8, %9, %cst_8 {dimension_numbers = #tpu.dot_dimension_numbers<[1], [0], [0], [1], [0, 0, 1, 1], [], []>} : vector<8x512xbf16>, vector<512x256xbf16>, vector<8x256xf32> -> vector<8x256xf32>
    %c0_9 = arith.constant 0 : index
    %c0_10 = arith.constant 0 : index
    %11 = vector.load %arg5[%c0_9, %c0_10] : memref<1x256xf32, #tpu.memory_space<vmem>>, vector<1x256xf32>
    %12 = vector.broadcast %11 : vector<1x256xf32> to vector<8x256xf32>
    %13 = arith.addf %10, %12 : vector<8x256xf32>
    %c0_11 = arith.constant 0 : index
    %c0_12 = arith.constant 0 : index
    %14 = vector.load %arg6[%c0_11, %c0_12] : memref<8x256xf32, #tpu.memory_space<vmem>>, vector<8x256xf32>
    tpu.vector_store %arg6[%c0_11, %c0_12], %13 {strides = array<i32>} : memref<8x256xf32, #tpu.memory_space<vmem>>, vector<8x256xf32>,
    return
  }
  func.func @transform_0(%arg0: i32) -> (i32, i32) {
    %c0_i32 = arith.constant 0 : i32
    %c0_i32_0 = arith.constant 0 : i32
    return %arg0, %c0_i32 : i32, i32
  }
  func.func @transform_1(%arg0: i32) -> (i32, i32) {
    %c0_i32 = arith.constant 0 : i32
    %c0_i32_0 = arith.constant 0 : i32
    %c0_i32_1 = arith.constant 0 : i32
    return %c0_i32, %c0_i32_0 : i32, i32
  }
  func.func @transform_2(%arg0: i32) -> (i32, i32) {
    %c0_i32 = arith.constant 0 : i32
    %c0_i32_0 = arith.constant 0 : i32
    %c0_i32_1 = arith.constant 0 : i32
    return %c0_i32, %c0_i32_0 : i32, i32
  }
  func.func @transform_3(%arg0: i32) -> (i32, i32) {
    %c0_i32 = arith.constant 0 : i32
    %c0_i32_0 = arith.constant 0 : i32
    %c0_i32_1 = arith.constant 0 : i32
    return %c0_i32, %c0_i32_0 : i32, i32
  }
  func.func @transform_4(%arg0: i32) -> (i32, i32) {
    %c0_i32 = arith.constant 0 : i32
    %c0_i32_0 = arith.constant 0 : i32
    %c0_i32_1 = arith.constant 0 : i32
    return %c0_i32, %c0_i32_0 : i32, i32
  }
  func.func @transform_5(%arg0: i32) -> (i32, i32) {
    %c0_i32 = arith.constant 0 : i32
    %c0_i32_0 = arith.constant 0 : i32
    return %arg0, %c0_i32 : i32, i32
  }
}

</mosaic_0001>

<llo_original>
// kernel: tpu_custom_call.1
$region0: #{tpu_custom_call.1}
  #allocation0 [shape = 'u32[]', space=smem, size = 0x4, offset = 0x4, fixed_abs, tag = 'smem constant byte address 0x4 - core index']
  #allocation1 [shape = 'u32[144,128]{1,0:T(1,128)}', space=vmem, size = 0x12000, scoped, tag = 'internal scratch']
  %s0 = inlined_call_operand.hbm [shape: bf16[8,128], index: 0, kind: input, shape index: {}]
  %s1 = inlined_call_operand.hbm [shape: bf16[128,512], index: 1, kind: input, shape index: {}]
  %s2 = inlined_call_operand.vmem [shape: f32[1,512], index: 2, kind: input, shape index: {}]
  %s3 = inlined_call_operand.hbm [shape: bf16[512,256], index: 3, kind: input, shape index: {}]
  %s4 = inlined_call_operand.vmem [shape: f32[1,256], index: 4, kind: input, shape index: {}]
  %s5 = inlined_call_operand.hbm [shape: f32[8,256], index: 5, kind: output, shape index: {}]
  %s6 = sld [smem:[#allocation0]]
  $region42: #{tpu_custom_call.1} parent=0
    _
  %s8 = ssub.s32 1, %s6
  %s9 = scalar_select 0, %s8, %s6
  $region1: #{tpu_custom_call.1} parent=0
    #allocation2 [shape = 'u8[2048]{0}', space=vmem, size = 0x800, scoped, tag = 'input window, operand 0, single buffered']
    #allocation3 [shape = 's32[1]{0}', space=sflag, size = 0x4, scoped, tag = 'scoped memory for tpu_custom_call.1']
    #allocation4 [shape = 's32[1]{0}', space=sflag, size = 0x4, scoped, tag = 'scoped memory for tpu_custom_call.1']
    #allocation5 [shape = 'u8[131072]{0}', space=vmem, size = 0x20000, scoped, tag = 'input window, operand 1, single buffered']
    #allocation6 [shape = 's32[1]{0}', space=sflag, size = 0x4, scoped, tag = 'scoped memory for tpu_custom_call.1']
    #allocation7 [shape = 'u8[262144]{0}', space=vmem, size = 0x40000, scoped, tag = 'input window, operand 3, single buffered']
    #allocation8 [shape = 'u8[8192]{0}', space=vmem, size = 0x2000, scoped, tag = 'output window, operand 0, single buffered']
    %10 = vsyncpa [#allocation3], 0
    %11 = vsyncpa [#allocation6], 0
    %12 = vsyncpa [#allocation4], 0
    // Predicated region
    $region2: #{tpu_custom_call.1} parent=1 // pred_check
      _
    $region3: #{tpu_custom_call.1} parent=1 // pred_check_branch
      %14 = sbr.rel (0) target = $region5
    $region4: #{tpu_custom_call.1} parent=1 // pred_region
      %s16 = ssub.s32 64, 64
      %17 = vsyncadd [#allocation3], %s16
      %s19 = sshll.u32 [#allocation2], 4
      %s20 = int_to_ptr.vmem [resolvable:$true] %s19
      %22 = dma.hbm_to_vmem [thread:$0]  %s0, 64, %s20, [#allocation3]
    $region5: #{tpu_custom_call.1} parent=1 // pred_fallthru
      _
    // Predicated region
    $region6: #{tpu_custom_call.1} parent=1 // pred_check
      _
    $region7: #{tpu_custom_call.1} parent=1 // pred_check_branch
      %24 = sbr.rel (0) target = $region9
    $region8: #{tpu_custom_call.1} parent=1 // pred_region
      %s26 = ssub.s32 4096, 4096
      %27 = vsyncadd [#allocation6], %s26
      %s28 = sshll.u32 [#allocation5], 4
      %s29 = int_to_ptr.vmem [resolvable:$true] %s28
      %34 = dma.hbm_to_vmem [thread:$0]  %s1, 4096, %s29, [#allocation6], 256, 256, 16
    $region9: #{tpu_custom_call.1} parent=1 // pred_fallthru
      _
    // Predicated region
    $region10: #{tpu_custom_call.1} parent=1 // pred_check
      _
    $region11: #{tpu_custom_call.1} parent=1 // pred_check_branch
      %36 = sbr.rel (0) target = $region13
    $region12: #{tpu_custom_call.1} parent=1 // pred_region
      _
    $region13: #{tpu_custom_call.1} parent=1 // pred_fallthru
      _
    // Predicated region
    $region14: #{tpu_custom_call.1} parent=1 // pred_check
      _
    $region15: #{tpu_custom_call.1} parent=1 // pred_check_branch
      %38 = sbr.rel (0) target = $region17
    $region16: #{tpu_custom_call.1} parent=1 // pred_region
      %s40 = ssub.s32 8192, 8192
      %41 = vsyncadd [#allocation6], %s40
      %s42 = sshll.u32 [#allocation7], 4
      %s43 = int_to_ptr.vmem [resolvable:$true] %s42
      %48 = dma.hbm_to_vmem [thread:$0]  %s3, 8192, %s43, [#allocation6], 128, 128, 8
    $region17: #{tpu_custom_call.1} parent=1 // pred_fallthru
      _
    // Predicated region
    $region18: #{tpu_custom_call.1} parent=1 // pred_check
      _
    $region19: #{tpu_custom_call.1} parent=1 // pred_check_branch
      %50 = sbr.rel (0) target = $region21
    $region20: #{tpu_custom_call.1} parent=1 // pred_region
      _
    $region21: #{tpu_custom_call.1} parent=1 // pred_fallthru
      _
    // Predicated region
    $region22: #{tpu_custom_call.1} parent=1 // pred_check
      _
    $region23: #{tpu_custom_call.1} parent=1 // pred_check_branch
      %52 = sbr.rel (0) target = $region25
    $region24: #{tpu_custom_call.1} parent=1 // pred_region
      %53 = dma.done [#allocation3], 64
    $region25: #{tpu_custom_call.1} parent=1 // pred_fallthru
      _
    // Predicated region
    $region26: #{tpu_custom_call.1} parent=1 // pred_check
      _
    $region27: #{tpu_custom_call.1} parent=1 // pred_check_branch
      %55 = sbr.rel (0) target = $region29
    $region28: #{tpu_custom_call.1} parent=1 // pred_region
      %56 = dma.done [#allocation6], 4096
    $region29: #{tpu_custom_call.1} parent=1 // pred_fallthru
      _
    // Predicated region
    $region30: #{tpu_custom_call.1} parent=1 // pred_check
      _
    $region31: #{tpu_custom_call.1} parent=1 // pred_check_branch
      %58 = sbr.rel (0) target = $region33
    $region32: #{tpu_custom_call.1} parent=1 // pred_region
      %59 = dma.done [#allocation6], 8192
    $region33: #{tpu_custom_call.1} parent=1 // pred_fallthru
      _
    %v61 = vld [vmem:[#allocation2] sm:$0xf]
    %v62 = vld [vmem:[#allocation5] sm:$0xff]
    %v63 = vld [vmem:[#allocation5 + $0x8] sm:$0xff]
    %v64 = vld [vmem:[#allocation5 + $0x10] sm:$0xff]
    %v65 = vld [vmem:[#allocation5 + $0x18] sm:$0xff]
    %v66 = vld [vmem:[#allocation5 + $0x20] sm:$0xff]
    %v67 = vld [vmem:[#allocation5 + $0x28] sm:$0xff]
    %v68 = vld [vmem:[#allocation5 + $0x30] sm:$0xff]
    %v69 = vld [vmem:[#allocation5 + $0x38] sm:$0xff]
    %v70 = vld [vmem:[#allocation5 + $0x40] sm:$0xff]
    %v71 = vld [vmem:[#allocation5 + $0x48] sm:$0xff]
    %v72 = vld [vmem:[#allocation5 + $0x50] sm:$0xff]
    %v73 = vld [vmem:[#allocation5 + $0x58] sm:$0xff]
    %v74 = vld [vmem:[#allocation5 + $0x60] sm:$0xff]
    %v75 = vld [vmem:[#allocation5 + $0x68] sm:$0xff]
    %v76 = vld [vmem:[#allocation5 + $0x70] sm:$0xff]
    %v77 = vld [vmem:[#allocation5 + $0x78] sm:$0xff]
    %v78 = vld [vmem:[#allocation5 + $0x80] sm:$0xff]
    %v79 = vld [vmem:[#allocation5 + $0x88] sm:$0xff]
    %v80 = vld [vmem:[#allocation5 + $0x90] sm:$0xff]
    %v81 = vld [vmem:[#allocation5 + $0x98] sm:$0xff]
    %v82 = vld [vmem:[#allocation5 + $0xa0] sm:$0xff]
    %v83 = vld [vmem:[#allocation5 + $0xa8] sm:$0xff]
    %v84 = vld [vmem:[#allocation5 + $0xb0] sm:$0xff]
    %v85 = vld [vmem:[#allocation5 + $0xb8] sm:$0xff]
    %v86 = vld [vmem:[#allocation5 + $0xc0] sm:$0xff]
    %v87 = vld [vmem:[#allocation5 + $0xc8] sm:$0xff]
    %v88 = vld [vmem:[#allocation5 + $0xd0] sm:$0xff]
    %v89 = vld [vmem:[#allocation5 + $0xd8] sm:$0xff]
    %v90 = vld [vmem:[#allocation5 + $0xe0] sm:$0xff]
    %v91 = vld [vmem:[#allocation5 + $0xe8] sm:$0xff]
    %v92 = vld [vmem:[#allocation5 + $0xf0] sm:$0xff]
    %v93 = vld [vmem:[#allocation5 + $0xf8] sm:$0xff]
    %v94 = vld [vmem:[%s2] sm:$0xf]
    %v96 = vlaneseq
    %v97 = vshrl.u32 %v96, 7
    %v98 = vsub.s32 0, %v97
    %v99 = vrot.slane %v94, %v98
    %v100 = vlaneseq
    %v101 = vshrl.u32 %v100, 7
    %v102 = vsub.s32 1, %v101
    %v103 = vrot.slane %v94, %v102
    %v104 = vlaneseq
    %v105 = vshrl.u32 %v104, 7
    %v106 = vsub.s32 2, %v105
    %v107 = vrot.slane %v94, %v106
    %v108 = vlaneseq
    %v109 = vshrl.u32 %v108, 7
    %v110 = vsub.s32 3, %v109
    %v111 = vrot.slane %v94, %v110
    %v148 = vunpack.c.l.b16 %v62
    %v149 = vunpack.c.h.b16 %v62
    %v150 = vunpack.c.l.b16 %v63
    %v151 = vunpack.c.h.b16 %v63
    %v152 = vunpack.c.l.b16 %v64
    %v153 = vunpack.c.h.b16 %v64
    %v154 = vunpack.c.l.b16 %v65
    %v155 = vunpack.c.h.b16 %v65
    %v156 = vunpack.c.l.b16 %v66
    %v157 = vunpack.c.h.b16 %v66
    %v158 = vunpack.c.l.b16 %v67
    %v159 = vunpack.c.h.b16 %v67
    %v160 = vunpack.c.l.b16 %v68
    %v161 = vunpack.c.h.b16 %v68
    %v162 = vunpack.c.l.b16 %v69
    %v163 = vunpack.c.h.b16 %v69
    %v164 = vunpack.c.l.b16 %v70
    %v165 = vunpack.c.h.b16 %v70
    %v166 = vunpack.c.l.b16 %v71
    %v167 = vunpack.c.h.b16 %v71
    %v168 = vunpack.c.l.b16 %v72
    %v169 = vunpack.c.h.b16 %v72
    %v170 = vunpack.c.l.b16 %v73
    %v171 = vunpack.c.h.b16 %v73
    %v172 = vunpack.c.l.b16 %v74
    %v173 = vunpack.c.h.b16 %v74
    %v174 = vunpack.c.l.b16 %v75
    %v175 = vunpack.c.h.b16 %v75
    %v176 = vunpack.c.l.b16 %v76
    %v177 = vunpack.c.h.b16 %v76
    %v178 = vunpack.c.l.b16 %v77
    %v179 = vunpack.c.h.b16 %v77
    %v180 = vunpack.c.l.b16 %v78
    %v181 = vunpack.c.h.b16 %v78
    %v182 = vunpack.c.l.b16 %v79
    %v183 = vunpack.c.h.b16 %v79
    %v184 = vunpack.c.l.b16 %v80
    %v185 = vunpack.c.h.b16 %v80
    %v186 = vunpack.c.l.b16 %v81
    %v187 = vunpack.c.h.b16 %v81
    %v188 = vunpack.c.l.b16 %v82
    %v189 = vunpack.c.h.b16 %v82
    %v190 = vunpack.c.l.b16 %v83
    %v191 = vunpack.c.h.b16 %v83
    %v192 = vunpack.c.l.b16 %v84
    %v193 = vunpack.c.h.b16 %v84
    %v194 = vunpack.c.l.b16 %v85
    %v195 = vunpack.c.h.b16 %v85
    %v196 = vunpack.c.l.b16 %v86
    %v197 = vunpack.c.h.b16 %v86
    %v198 = vunpack.c.l.b16 %v87
    %v199 = vunpack.c.h.b16 %v87
    %v200 = vunpack.c.l.b16 %v88
    %v201 = vunpack.c.h.b16 %v88
    %v202 = vunpack.c.l.b16 %v89
    %v203 = vunpack.c.h.b16 %v89
    %v204 = vunpack.c.l.b16 %v90
    %v205 = vunpack.c.h.b16 %v90
    %v206 = vunpack.c.l.b16 %v91
    %v207 = vunpack.c.h.b16 %v91
    %v208 = vunpack.c.l.b16 %v92
    %v209 = vunpack.c.h.b16 %v92
    %v210 = vunpack.c.l.b16 %v93
    %v211 = vunpack.c.h.b16 %v93
    %v212 = vpack.c.b16 %v152, %v148
    %v213 = vpack.c.b16 %v153, %v149
    %v214 = vpack.c.b16 %v154, %v150
    %v215 = vpack.c.b16 %v155, %v151
    %v216 = vpack.c.b16 %v160, %v156
    %v217 = vpack.c.b16 %v161, %v157
    %v218 = vpack.c.b16 %v162, %v158
    %v219 = vpack.c.b16 %v163, %v159
    %v220 = vpack.c.b16 %v168, %v164
    %v221 = vpack.c.b16 %v169, %v165
    %v222 = vpack.c.b16 %v170, %v166
    %v223 = vpack.c.b16 %v171, %v167
    %v224 = vpack.c.b16 %v176, %v172
    %v225 = vpack.c.b16 %v177, %v173
    %v226 = vpack.c.b16 %v178, %v174
    %v227 = vpack.c.b16 %v179, %v175
    %v228 = vpack.c.b16 %v184, %v180
    %v229 = vpack.c.b16 %v185, %v181
    %v230 = vpack.c.b16 %v186, %v182
    %v231 = vpack.c.b16 %v187, %v183
    %v232 = vpack.c.b16 %v192, %v188
    %v233 = vpack.c.b16 %v193, %v189
    %v234 = vpack.c.b16 %v194, %v190
    %v235 = vpack.c.b16 %v195, %v191
    %v236 = vpack.c.b16 %v200, %v196
    %v237 = vpack.c.b16 %v201, %v197
    %v238 = vpack.c.b16 %v202, %v198
    %v239 = vpack.c.b16 %v203, %v199
    %v240 = vpack.c.b16 %v208, %v204
    %v241 = vpack.c.b16 %v209, %v205
    %v242 = vpack.c.b16 %v210, %v206
    %v243 = vpack.c.b16 %v211, %v207
    %276 = vmatprep.subr.bf16.mxu0 %v213
    %277 = vmatpush1.bf16.msra.mxu0 %v212
    %278 = vmatprep.subr.bf16.mxu0 %v217
    %279 = vmatpush1.bf16.msra.mxu0 %v216
    %280 = vmatprep.subr.bf16.mxu0 %v221
    %281 = vmatpush1.bf16.msra.mxu0 %v220
    %282 = vmatprep.subr.bf16.mxu0 %v225
    %283 = vmatpush1.bf16.msra.mxu0 %v224
    %284 = vmatprep.subr.bf16.mxu0 %v229
    %285 = vmatpush1.bf16.msra.mxu0 %v228
    %286 = vmatprep.subr.bf16.mxu0 %v233
    %287 = vmatpush1.bf16.msra.mxu0 %v232
    %288 = vmatprep.subr.bf16.mxu0 %v237
    %289 = vmatpush1.bf16.msra.mxu0 %v236
    %290 = vmatprep.subr.bf16.mxu0 %v241
    %291 = vmatpush1.bf16.msra.mxu0 %v240
    %292 = vmatprep.subr.bf16.mxu0 0
    %293 = vmatpush1.bf16.msra.mxu0 0
    %294 = vmatprep.subr.bf16.mxu0 0
    %295 = vmatpush1.bf16.msra.mxu0 0
    %296 = vmatprep.subr.bf16.mxu0 0
    %297 = vmatpush1.bf16.msra.mxu0 0
    %298 = vmatprep.subr.bf16.mxu0 0
    %299 = vmatpush1.bf16.msra.mxu0 0
    %300 = vmatprep.subr.bf16.mxu0 0
    %301 = vmatpush1.bf16.msra.mxu0 0
    %302 = vmatprep.subr.bf16.mxu0 0
    %303 = vmatpush1.bf16.msra.mxu0 0
    %304 = vmatprep.subr.bf16.mxu0 0
    %305 = vmatpush1.bf16.msra.mxu0 0
    %306 = vmatprep.subr.bf16.mxu0 0
    %307 = vmatpush1.bf16.msra.mxu0 0
    %308 = vmatprep.mubr.bf16.mxu0 0
    %309 = vmatmul.mubr.bf16.gmra.mrb[0].mxu0 %v61
    %v310 = vpop.f32.mrb[0].mxu0
    %v311 = vadd.f32 %v99, %v310
    %v312 = vpop.f32.mrb[0].mxu0
    %v313 = vadd.f32 %v103, %v312
    %v314 = vpop.f32.mrb[0].mxu0
    %v315 = vpop.f32.mrb[0].mxu0
    %316 = vdwg.mxu0
    %317 = vmatprep.subr.bf16.mxu0 %v215
    %318 = vmatpush1.bf16.msra.mxu0 %v214
    %319 = vmatprep.subr.bf16.mxu0 %v219
    %320 = vmatpush1.bf16.msra.mxu0 %v218
    %321 = vmatprep.subr.bf16.mxu0 %v223
    %322 = vmatpush1.bf16.msra.mxu0 %v222
    %323 = vmatprep.subr.bf16.mxu0 %v227
    %324 = vmatpush1.bf16.msra.mxu0 %v226
    %325 = vmatprep.subr.bf16.mxu0 %v231
    %326 = vmatpush1.bf16.msra.mxu0 %v230
    %327 = vmatprep.subr.bf16.mxu0 %v235
    %328 = vmatpush1.bf16.msra.mxu0 %v234
    %329 = vmatprep.subr.bf16.mxu0 %v239
    %330 = vmatpush1.bf16.msra.mxu0 %v238
    %331 = vmatprep.subr.bf16.mxu0 %v243
    %332 = vmatpush1.bf16.msra.mxu0 %v242
    %333 = vmatprep.subr.bf16.mxu0 0
    %334 = vmatpush1.bf16.msra.mxu0 0
    %335 = vmatprep.subr.bf16.mxu0 0
    %336 = vmatpush1.bf16.msra.mxu0 0
    %337 = vmatprep.subr.bf16.mxu0 0
    %338 = vmatpush1.bf16.msra.mxu0 0
    %339 = vmatprep.subr.bf16.mxu0 0
    %340 = vmatpush1.bf16.msra.mxu0 0
    %341 = vmatprep.subr.bf16.mxu0 0
    %342 = vmatpush1.bf16.msra.mxu0 0
    %343 = vmatprep.subr.bf16.mxu0 0
    %344 = vmatpush1.bf16.msra.mxu0 0
    %345 = vmatprep.subr.bf16.mxu0 0
    %346 = vmatpush1.bf16.msra.mxu0 0
    %347 = vmatprep.subr.bf16.mxu0 0
    %348 = vmatpush1.bf16.msra.mxu0 0
    %349 = vmatprep.mubr.bf16.mxu0 0
    %350 = vmatmul.mubr.bf16.gmra.mrb[0].mxu0 %v61
    %v351 = vpop.f32.mrb[0].mxu0
    %v352 = vadd.f32 %v107, %v351
    %v353 = vpop.f32.mrb[0].mxu0
    %v354 = vadd.f32 %v111, %v353
    %v355 = vpop.f32.mrb[0].mxu0
    %v356 = vpop.f32.mrb[0].mxu0
    %357 = vdwg.mxu0
    %v358 = vmax.f32 %v311, 0.0
    %v359 = vmax.f32 %v313, 0.0
    %v360 = vmax.f32 %v352, 0.0
    %v361 = vmax.f32 %v354, 0.0
    %v362 = vpack.c.bf16 %v358, %v358
    %v363 = vpack.c.bf16 %v359, %v359
    %v364 = vpack.c.bf16 %v360, %v360
    %v365 = vpack.c.bf16 %v361, %v361
    %v366 = vld [vmem:[#allocation7] sm:$0xff]
    %v367 = vld [vmem:[#allocation7 + $0x8] sm:$0xff]
    %v368 = vld [vmem:[#allocation7 + $0x10] sm:$0xff]
    %v369 = vld [vmem:[#allocation7 + $0x18] sm:$0xff]
    %v370 = vld [vmem:[#allocation7 + $0x20] sm:$0xff]
    %v371 = vld [vmem:[#allocation7 + $0x28] sm:$0xff]
    %v372 = vld [vmem:[#allocation7 + $0x30] sm:$0xff]
    %v373 = vld [vmem:[#allocation7 + $0x38] sm:$0xff]
    %v374 = vld [vmem:[#allocation7 + $0x40] sm:$0xff]
    %v375 = vld [vmem:[#allocation7 + $0x48] sm:$0xff]
    %v376 = vld [vmem:[#allocation7 + $0x50] sm:$0xff]
    %v377 = vld [vmem:[#allocation7 + $0x58] sm:$0xff]
    %v378 = vld [vmem:[#allocation7 + $0x60] sm:$0xff]
    %v379 = vld [vmem:[#allocation7 + $0x68] sm:$0xff]
    %v380 = vld [vmem:[#allocation7 + $0x70] sm:$0xff]
    %v381 = vld [vmem:[#allocation7 + $0x78] sm:$0xff]
    %v382 = vld [vmem:[#allocation7 + $0x80] sm:$0xff]
    %v383 = vld [vmem:[#allocation7 + $0x88] sm:$0xff]
    %v384 = vld [vmem:[#allocation7 + $0x90] sm:$0xff]
    %v385 = vld [vmem:[#allocation7 + $0x98] sm:$0xff]
    %v386 = vld [vmem:[#allocation7 + $0xa0] sm:$0xff]
    %v387 = vld [vmem:[#allocation7 + $0xa8] sm:$0xff]
    %v388 = vld [vmem:[#allocation7 + $0xb0] sm:$0xff]
    %v389 = vld [vmem:[#allocation7 + $0xb8] sm:$0xff]
    %v390 = vld [vmem:[#allocation7 + $0xc0] sm:$0xff]
    %v391 = vld [vmem:[#allocation7 + $0xc8] sm:$0xff]
    %v392 = vld [vmem:[#allocation7 + $0xd0] sm:$0xff]
    %v393 = vld [vmem:[#allocation7 + $0xd8] sm:$0xff]
    %v394 = vld [vmem:[#allocation7 + $0xe0] sm:$0xff]
    %v395 = vld [vmem:[#allocation7 + $0xe8] sm:$0xff]
    %v396 = vld [vmem:[#allocation7 + $0xf0] sm:$0xff]
    %v397 = vld [vmem:[#allocation7 + $0xf8] sm:$0xff]
    %v398 = vld [vmem:[#allocation7 + $0x100] sm:$0xff]
    %v399 = vld [vmem:[#allocation7 + $0x108] sm:$0xff]
    %v400 = vld [vmem:[#allocation7 + $0x110] sm:$0xff]
    %v401 = vld [vmem:[#allocation7 + $0x118] sm:$0xff]
    %v402 = vld [vmem:[#allocation7 + $0x120] sm:$0xff]
    %v403 = vld [vmem:[#allocation7 + $0x128] sm:$0xff]
    %v404 = vld [vmem:[#allocation7 + $0x130] sm:$0xff]
    %v405 = vld [vmem:[#allocation7 + $0x138] sm:$0xff]
    %v406 = vld [vmem:[#allocation7 + $0x140] sm:$0xff]
    %v407 = vld [vmem:[#allocation7 + $0x148] sm:$0xff]
    %v408 = vld [vmem:[#allocation7 + $0x150] sm:$0xff]
    %v409 = vld [vmem:[#allocation7 + $0x158] sm:$0xff]
    %v410 = vld [vmem:[#allocation7 + $0x160] sm:$0xff]
    %v411 = vld [vmem:[#allocation7 + $0x168] sm:$0xff]
    %v412 = vld [vmem:[#allocation7 + $0x170] sm:$0xff]
    %v413 = vld [vmem:[#allocation7 + $0x178] sm:$0xff]
    %v414 = vld [vmem:[#allocation7 + $0x180] sm:$0xff]
    %v415 = vld [vmem:[#allocation7 + $0x188] sm:$0xff]
    %v416 = vld [vmem:[#allocation7 + $0x190] sm:$0xff]
    %v417 = vld [vmem:[#allocation7 + $0x198] sm:$0xff]
    %v418 = vld [vmem:[#allocation7 + $0x1a0] sm:$0xff]
    %v419 = vld [vmem:[#allocation7 + $0x1a8] sm:$0xff]
    %v420 = vld [vmem:[#allocation7 + $0x1b0] sm:$0xff]
    %v421 = vld [vmem:[#allocation7 + $0x1b8] sm:$0xff]
    %v422 = vld [vmem:[#allocation7 + $0x1c0] sm:$0xff]
    %v423 = vld [vmem:[#allocation7 + $0x1c8] sm:$0xff]
    %v424 = vld [vmem:[#allocation7 + $0x1d0] sm:$0xff]
    %v425 = vld [vmem:[#allocation7 + $0x1d8] sm:$0xff]
    %v426 = vld [vmem:[#allocation7 + $0x1e0] sm:$0xff]
    %v427 = vld [vmem:[#allocation7 + $0x1e8] sm:$0xff]
    %v428 = vld [vmem:[#allocation7 + $0x1f0] sm:$0xff]
    %v429 = vld [vmem:[#allocation7 + $0x1f8] sm:$0xff]
    %v430 = vld [vmem:[%s4] sm:$0x3]
    %v432 = vlaneseq
    %v433 = vshrl.u32 %v432, 7
    %v434 = vsub.s32 0, %v433
    %v435 = vrot.slane %v430, %v434
    %v436 = vlaneseq
    %v437 = vshrl.u32 %v436, 7
    %v438 = vsub.s32 1, %v437
    %v439 = vrot.slane %v430, %v438
    %v506 = vunpack.c.l.b16 %v366
    %v507 = vunpack.c.h.b16 %v366
    %v508 = vunpack.c.l.b16 %v367
    %v509 = vunpack.c.h.b16 %v367
    %v510 = vunpack.c.l.b16 %v368
    %v511 = vunpack.c.h.b16 %v368
    %v512 = vunpack.c.l.b16 %v369
    %v513 = vunpack.c.h.b16 %v369
    %v514 = vunpack.c.l.b16 %v370
    %v515 = vunpack.c.h.b16 %v370
    %v516 = vunpack.c.l.b16 %v371
    %v517 = vunpack.c.h.b16 %v371
    %v518 = vunpack.c.l.b16 %v372
    %v519 = vunpack.c.h.b16 %v372
    %v520 = vunpack.c.l.b16 %v373
    %v521 = vunpack.c.h.b16 %v373
    %v522 = vunpack.c.l.b16 %v374
    %v523 = vunpack.c.h.b16 %v374
    %v524 = vunpack.c.l.b16 %v375
    %v525 = vunpack.c.h.b16 %v375
    %v526 = vunpack.c.l.b16 %v376
    %v527 = vunpack.c.h.b16 %v376
    %v528 = vunpack.c.l.b16 %v377
    %v529 = vunpack.c.h.b16 %v377
    %v530 = vunpack.c.l.b16 %v378
    %v531 = vunpack.c.h.b16 %v378
    %v532 = vunpack.c.l.b16 %v379
    %v533 = vunpack.c.h.b16 %v379
    %v534 = vunpack.c.l.b16 %v380
    %v535 = vunpack.c.h.b16 %v380
    %v536 = vunpack.c.l.b16 %v381
    %v537 = vunpack.c.h.b16 %v381
    %v538 = vunpack.c.l.b16 %v382
    %v539 = vunpack.c.h.b16 %v382
    %v540 = vunpack.c.l.b16 %v383
    %v541 = vunpack.c.h.b16 %v383
    %v542 = vunpack.c.l.b16 %v384
    %v543 = vunpack.c.h.b16 %v384
    %v544 = vunpack.c.l.b16 %v385
    %v545 = vunpack.c.h.b16 %v385
    %v546 = vunpack.c.l.b16 %v386
    %v547 = vunpack.c.h.b16 %v386
    %v548 = vunpack.c.l.b16 %v387
    %v549 = vunpack.c.h.b16 %v387
    %v550 = vunpack.c.l.b16 %v388
    %v551 = vunpack.c.h.b16 %v388
    %v552 = vunpack.c.l.b16 %v389
    %v553 = vunpack.c.h.b16 %v389
    %v554 = vunpack.c.l.b16 %v390
    %v555 = vunpack.c.h.b16 %v390
    %v556 = vunpack.c.l.b16 %v391
    %v557 = vunpack.c.h.b16 %v391
    %v558 = vunpack.c.l.b16 %v392
    %v559 = vunpack.c.h.b16 %v392
    %v560 = vunpack.c.l.b16 %v393
    %v561 = vunpack.c.h.b16 %v393
    %v562 = vunpack.c.l.b16 %v394
    %v563 = vunpack.c.h.b16 %v394
    %v564 = vunpack.c.l.b16 %v395
    %v565 = vunpack.c.h.b16 %v395
    %v566 = vunpack.c.l.b16 %v396
    %v567 = vunpack.c.h.b16 %v396
    %v568 = vunpack.c.l.b16 %v397
    %v569 = vunpack.c.h.b16 %v397
    %v570 = vunpack.c.l.b16 %v398
    %v571 = vunpack.c.h.b16 %v398
    %v572 = vunpack.c.l.b16 %v399
    %v573 = vunpack.c.h.b16 %v399
    %v574 = vunpack.c.l.b16 %v400
    %v575 = vunpack.c.h.b16 %v400
    %v576 = vunpack.c.l.b16 %v401
    %v577 = vunpack.c.h.b16 %v401
    %v578 = vunpack.c.l.b16 %v402
    %v579 = vunpack.c.h.b16 %v402
    %v580 = vunpack.c.l.b16 %v403
    %v581 = vunpack.c.h.b16 %v403
    %v582 = vunpack.c.l.b16 %v404
    %v583 = vunpack.c.h.b16 %v404
    %v584 = vunpack.c.l.b16 %v405
    %v585 = vunpack.c.h.b16 %v405
    %v586 = vunpack.c.l.b16 %v406
    %v587 = vunpack.c.h.b16 %v406
    %v588 = vunpack.c.l.b16 %v407
    %v589 = vunpack.c.h.b16 %v407
    %v590 = vunpack.c.l.b16 %v408
    %v591 = vunpack.c.h.b16 %v408
    %v592 = vunpack.c.l.b16 %v409
    %v593 = vunpack.c.h.b16 %v409
    %v594 = vunpack.c.l.b16 %v410
    %v595 = vunpack.c.h.b16 %v410
    %v596 = vunpack.c.l.b16 %v411
    %v597 = vunpack.c.h.b16 %v411
    %v598 = vunpack.c.l.b16 %v412
    %v599 = vunpack.c.h.b16 %v412
    %v600 = vunpack.c.l.b16 %v413
    %v601 = vunpack.c.h.b16 %v413
    %v602 = vunpack.c.l.b16 %v414
    %v603 = vunpack.c.h.b16 %v414
    %v604 = vunpack.c.l.b16 %v415
    %v605 = vunpack.c.h.b16 %v415
    %v606 = vunpack.c.l.b16 %v416
    %v607 = vunpack.c.h.b16 %v416
    %v608 = vunpack.c.l.b16 %v417
    %v609 = vunpack.c.h.b16 %v417
    %v610 = vunpack.c.l.b16 %v418
    %v611 = vunpack.c.h.b16 %v418
    %v612 = vunpack.c.l.b16 %v419
    %v613 = vunpack.c.h.b16 %v419
    %v614 = vunpack.c.l.b16 %v420
    %v615 = vunpack.c.h.b16 %v420
    %v616 = vunpack.c.l.b16 %v421
    %v617 = vunpack.c.h.b16 %v421
    %v618 = vunpack.c.l.b16 %v422
    %v619 = vunpack.c.h.b16 %v422
    %v620 = vunpack.c.l.b16 %v423
    %v621 = vunpack.c.h.b16 %v423
    %v622 = vunpack.c.l.b16 %v424
    %v623 = vunpack.c.h.b16 %v424
    %v624 = vunpack.c.l.b16 %v425
    %v625 = vunpack.c.h.b16 %v425
    %v626 = vunpack.c.l.b16 %v426
    %v627 = vunpack.c.h.b16 %v426
    %v628 = vunpack.c.l.b16 %v427
    %v629 = vunpack.c.h.b16 %v427
    %v630 = vunpack.c.l.b16 %v428
    %v631 = vunpack.c.h.b16 %v428
    %v632 = vunpack.c.l.b16 %v429
    %v633 = vunpack.c.h.b16 %v429
    %v634 = vpack.c.b16 %v508, %v506
    %v635 = vpack.c.b16 %v509, %v507
    %v636 = vpack.c.b16 %v512, %v510
    %v637 = vpack.c.b16 %v513, %v511
    %v638 = vpack.c.b16 %v516, %v514
    %v639 = vpack.c.b16 %v517, %v515
    %v640 = vpack.c.b16 %v520, %v518
    %v641 = vpack.c.b16 %v521, %v519
    %v642 = vpack.c.b16 %v524, %v522
    %v643 = vpack.c.b16 %v525, %v523
    %v644 = vpack.c.b16 %v528, %v526
    %v645 = vpack.c.b16 %v529, %v527
    %v646 = vpack.c.b16 %v532, %v530
    %v647 = vpack.c.b16 %v533, %v531
    %v648 = vpack.c.b16 %v536, %v534
    %v649 = vpack.c.b16 %v537, %v535
    %v650 = vpack.c.b16 %v540, %v538
    %v651 = vpack.c.b16 %v541, %v539
    %v652 = vpack.c.b16 %v544, %v542
    %v653 = vpack.c.b16 %v545, %v543
    %v654 = vpack.c.b16 %v548, %v546
    %v655 = vpack.c.b16 %v549, %v547
    %v656 = vpack.c.b16 %v552, %v550
    %v657 = vpack.c.b16 %v553, %v551
    %v658 = vpack.c.b16 %v556, %v554
    %v659 = vpack.c.b16 %v557, %v555
    %v660 = vpack.c.b16 %v560, %v558
    %v661 = vpack.c.b16 %v561, %v559
    %v662 = vpack.c.b16 %v564, %v562
    %v663 = vpack.c.b16 %v565, %v563
    %v664 = vpack.c.b16 %v568, %v566
    %v665 = vpack.c.b16 %v569, %v567
    %v666 = vpack.c.b16 %v572, %v570
    %v667 = vpack.c.b16 %v573, %v571
    %v668 = vpack.c.b16 %v576, %v574
    %v669 = vpack.c.b16 %v577, %v575
    %v670 = vpack.c.b16 %v580, %v578
    %v671 = vpack.c.b16 %v581, %v579
    %v672 = vpack.c.b16 %v584, %v582
    %v673 = vpack.c.b16 %v585, %v583
    %v674 = vpack.c.b16 %v588, %v586
    %v675 = vpack.c.b16 %v589, %v587
    %v676 = vpack.c.b16 %v592, %v590
    %v677 = vpack.c.b16 %v593, %v591
    %v678 = vpack.c.b16 %v596, %v594
    %v679 = vpack.c.b16 %v597, %v595
    %v680 = vpack.c.b16 %v600, %v598
    %v681 = vpack.c.b16 %v601, %v599
    %v682 = vpack.c.b16 %v604, %v602
    %v683 = vpack.c.b16 %v605, %v603
    %v684 = vpack.c.b16 %v608, %v606
    %v685 = vpack.c.b16 %v609, %v607
    %v686 = vpack.c.b16 %v612, %v610
    %v687 = vpack.c.b16 %v613, %v611
    %v688 = vpack.c.b16 %v616, %v614
    %v689 = vpack.c.b16 %v617, %v615
    %v690 = vpack.c.b16 %v620, %v618
    %v691 = vpack.c.b16 %v621, %v619
    %v692 = vpack.c.b16 %v624, %v622
    %v693 = vpack.c.b16 %v625, %v623
    %v694 = vpack.c.b16 %v628, %v626
    %v695 = vpack.c.b16 %v629, %v627
    %v696 = vpack.c.b16 %v632, %v630
    %v697 = vpack.c.b16 %v633, %v631
    %762 = vmatprep.subr.bf16.mxu0 %v635
    %763 = vmatpush1.bf16.msra.mxu0 %v634
    %764 = vmatprep.subr.bf16.mxu0 %v637
    %765 = vmatpush1.bf16.msra.mxu0 %v636
    %766 = vmatprep.subr.bf16.mxu0 %v639
    %767 = vmatpush1.bf16.msra.mxu0 %v638
    %768 = vmatprep.subr.bf16.mxu0 %v641
    %769 = vmatpush1.bf16.msra.mxu0 %v640
    %770 = vmatprep.subr.bf16.mxu0 %v643
    %771 = vmatpush1.bf16.msra.mxu0 %v642
    %772 = vmatprep.subr.bf16.mxu0 %v645
    %773 = vmatpush1.bf16.msra.mxu0 %v644
    %774 = vmatprep.subr.bf16.mxu0 %v647
    %775 = vmatpush1.bf16.msra.mxu0 %v646
    %776 = vmatprep.subr.bf16.mxu0 %v649
    %777 = vmatpush1.bf16.msra.mxu0 %v648
    %778 = vmatprep.subr.bf16.mxu0 %v651
    %779 = vmatpush1.bf16.msra.mxu0 %v650
    %780 = vmatprep.subr.bf16.mxu0 %v653
    %781 = vmatpush1.bf16.msra.mxu0 %v652
    %782 = vmatprep.subr.bf16.mxu0 %v655
    %783 = vmatpush1.bf16.msra.mxu0 %v654
    %784 = vmatprep.subr.bf16.mxu0 %v657
    %785 = vmatpush1.bf16.msra.mxu0 %v656
    %786 = vmatprep.subr.bf16.mxu0 %v659
    %787 = vmatpush1.bf16.msra.mxu0 %v658
    %788 = vmatprep.subr.bf16.mxu0 %v661
    %789 = vmatpush1.bf16.msra.mxu0 %v660
    %790 = vmatprep.subr.bf16.mxu0 %v663
    %791 = vmatpush1.bf16.msra.mxu0 %v662
    %792 = vmatprep.subr.bf16.mxu0 %v665
    %793 = vmatpush1.bf16.msra.mxu0 %v664
    %794 = vmatprep.mubr.bf16.mxu0 %v363
    %795 = vmatmul.mubr.bf16.gmra.mrb[0].mxu0 %v362
    %v796 = vpop.f32.mrb[0].mxu0
    %v797 = vadd.f32 %v435, %v796
    %v798 = vpop.f32.mrb[0].mxu0
    %v799 = vadd.f32 %v439, %v798
    %v800 = vpop.f32.mrb[0].mxu0
    %v801 = vpop.f32.mrb[0].mxu0
    %802 = vdwg.mxu0
    %803 = vmatprep.subr.bf16.mxu0 %v667
    %804 = vmatpush1.bf16.msra.mxu0 %v666
    %805 = vmatprep.subr.bf16.mxu0 %v669
    %806 = vmatpush1.bf16.msra.mxu0 %v668
    %807 = vmatprep.subr.bf16.mxu0 %v671
    %808 = vmatpush1.bf16.msra.mxu0 %v670
    %809 = vmatprep.subr.bf16.mxu0 %v673
    %810 = vmatpush1.bf16.msra.mxu0 %v672
    %811 = vmatprep.subr.bf16.mxu0 %v675
    %812 = vmatpush1.bf16.msra.mxu0 %v674
    %813 = vmatprep.subr.bf16.mxu0 %v677
    %814 = vmatpush1.bf16.msra.mxu0 %v676
    %815 = vmatprep.subr.bf16.mxu0 %v679
    %816 = vmatpush1.bf16.msra.mxu0 %v678
    %817 = vmatprep.subr.bf16.mxu0 %v681
    %818 = vmatpush1.bf16.msra.mxu0 %v680
    %819 = vmatprep.subr.bf16.mxu0 %v683
    %820 = vmatpush1.bf16.msra.mxu0 %v682
    %821 = vmatprep.subr.bf16.mxu0 %v685
    %822 = vmatpush1.bf16.msra.mxu0 %v684
    %823 = vmatprep.subr.bf16.mxu0 %v687
    %824 = vmatpush1.bf16.msra.mxu0 %v686
    %825 = vmatprep.subr.bf16.mxu0 %v689
    %826 = vmatpush1.bf16.msra.mxu0 %v688
    %827 = vmatprep.subr.bf16.mxu0 %v691
    %828 = vmatpush1.bf16.msra.mxu0 %v690
    %829 = vmatprep.subr.bf16.mxu0 %v693
    %830 = vmatpush1.bf16.msra.mxu0 %v692
    %831 = vmatprep.subr.bf16.mxu0 %v695
    %832 = vmatpush1.bf16.msra.mxu0 %v694
    %833 = vmatprep.subr.bf16.mxu0 %v697
    %834 = vmatpush1.bf16.msra.mxu0 %v696
    %835 = vmatprep.mubr.bf16.mxu0 %v365
    %836 = vmatmul.mubr.bf16.gmra.mrb[0].mxu0 %v364
    %v837 = vpop.f32.mrb[0].mxu0
    %v838 = vadd.f32 %v797, %v837
    %v839 = vpop.f32.mrb[0].mxu0
    %v840 = vadd.f32 %v799, %v839
    %v841 = vpop.f32.mrb[0].mxu0
    %v842 = vpop.f32.mrb[0].mxu0
    %843 = vdwg.mxu0
    %844 = vst [vmem:[#allocation8] sm:$0xff] %v838
    %845 = vst [vmem:[#allocation8 + $0x8] sm:$0xff] %v840
    // Predicated region
    $region34: #{tpu_custom_call.1} parent=1 // pred_check
      _
    $region35: #{tpu_custom_call.1} parent=1 // pred_check_branch
      %847 = sbr.rel (0) target = $region37
    $region36: #{tpu_custom_call.1} parent=1 // pred_region
      %s849 = ssub.s32 256, 256
      %850 = vsyncadd [#allocation4], %s849
      %s852 = sshll.u32 [#allocation8], 4
      %s853 = int_to_ptr.vmem [resolvable:$true] %s852
      %855 = dma.vmem_to_hbm [thread:$0]  %s853, 256, %s5, [#allocation4]
    $region37: #{tpu_custom_call.1} parent=1 // pred_fallthru
      _
    // Predicated region
    $region38: #{tpu_custom_call.1} parent=1 // pred_check
      _
    $region39: #{tpu_custom_call.1} parent=1 // pred_check_branch
      %857 = sbr.rel (0) target = $region41
    $region40: #{tpu_custom_call.1} parent=1 // pred_region
      %858 = dma.done [#allocation4], 256
    $region41: #{tpu_custom_call.1} parent=1 // pred_fallthru
      _
    %859 = vsyncpa [#allocation3], 1
    %860 = vsyncpa [#allocation6], 1
    %861 = vsyncpa [#allocation4], 1

// kernel: tpu_custom_call.1
$region0: #{tpu_custom_call.1}
  #allocation0 [shape = 'u32[]', space=smem, size = 0x4, offset = 0x4, fixed_abs, tag = 'smem constant byte address 0x4 - core index']
  #allocation1 [shape = 'u32[144,128]{1,0:T(1,128)}', space=vmem, size = 0x12000, scoped, tag = 'internal scratch']
  %s0 = inlined_call_operand.hbm [shape: bf16[8,128], index: 0, kind: input, shape index: {}]
  %s1 = inlined_call_operand.hbm [shape: bf16[128,512], index: 1, kind: input, shape index: {}]
  %s2 = inlined_call_operand.vmem [shape: f32[1,512], index: 2, kind: input, shape index: {}]
  %s3 = inlined_call_operand.hbm [shape: bf16[512,256], index: 3, kind: input, shape index: {}]
  %s4 = inlined_call_operand.vmem [shape: f32[1,256], index: 4, kind: input, shape index: {}]
  %s5 = inlined_call_operand.hbm [shape: f32[8,256], index: 5, kind: output, shape index: {}]
  %s6 = sld [smem:[#allocation0]]
  $region42: #{tpu_custom_call.1} parent=0
    _
  %s8 = ssub.s32 1, %s6
  %s9 = scalar_select 0, %s8, %s6
  $region1: #{tpu_custom_call.1} parent=0
    #allocation2 [shape = 'u8[2048]{0}', space=vmem, size = 0x800, scoped, tag = 'input window, operand 0, single buffered']
    #allocation3 [shape = 's32[1]{0}', space=sflag, size = 0x4, scoped, tag = 'scoped memory for tpu_custom_call.1']
    #allocation4 [shape = 's32[1]{0}', space=sflag, size = 0x4, scoped, tag = 'scoped memory for tpu_custom_call.1']
    #allocation5 [shape = 'u8[131072]{0}', space=vmem, size = 0x20000, scoped, tag = 'input window, operand 1, single buffered']
    #allocation6 [shape = 's32[1]{0}', space=sflag, size = 0x4, scoped, tag = 'scoped memory for tpu_custom_call.1']
    #allocation7 [shape = 'u8[262144]{0}', space=vmem, size = 0x40000, scoped, tag = 'input window, operand 3, single buffered']
    #allocation8 [shape = 'u8[8192]{0}', space=vmem, size = 0x2000, scoped, tag = 'output window, operand 0, single buffered']
    %10 = vsyncpa [#allocation3], 0
    %11 = vsyncpa [#allocation6], 0
    %12 = vsyncpa [#allocation4], 0
    // Predicated region
    $region2: #{tpu_custom_call.1} parent=1 // pred_check
      _
    $region3: #{tpu_custom_call.1} parent=1 // pred_check_branch
      %14 = sbr.rel (0) target = $region5
    $region4: #{tpu_custom_call.1} parent=1 // pred_region
      %s16 = ssub.s32 64, 64
      %17 = vsyncadd [#allocation3], %s16
      %s19 = sshll.u32 [#allocation2], 4
      %s20 = int_to_ptr.vmem [resolvable:$true] %s19
      %22 = dma.hbm_to_vmem [thread:$0]  %s0, 64, %s20, [#allocation3]
    $region5: #{tpu_custom_call.1} parent=1 // pred_fallthru
      _
    // Predicated region
    $region6: #{tpu_custom_call.1} parent=1 // pred_check
      _
    $region7: #{tpu_custom_call.1} parent=1 // pred_check_branch
      %24 = sbr.rel (0) target = $region9
    $region8: #{tpu_custom_call.1} parent=1 // pred_region
      %s26 = ssub.s32 4096, 4096
      %27 = vsyncadd [#allocation6], %s26
      %s28 = sshll.u32 [#allocation5], 4
      %s29 = int_to_ptr.vmem [resolvable:$true] %s28
      %34 = dma.hbm_to_vmem [thread:$0]  %s1, 4096, %s29, [#allocation6], 256, 256, 16
    $region9: #{tpu_custom_call.1} parent=1 // pred_fallthru
      _
    // Predicated region
    $region10: #{tpu_custom_call.1} parent=1 // pred_check
      _
    $region11: #{tpu_custom_call.1} parent=1 // pred_check_branch
      %36 = sbr.rel (0) target = $region13
    $region12: #{tpu_custom_call.1} parent=1 // pred_region
      _
    $region13: #{tpu_custom_call.1} parent=1 // pred_fallthru
      _
    // Predicated region
    $region14: #{tpu_custom_call.1} parent=1 // pred_check
      _
    $region15: #{tpu_custom_call.1} parent=1 // pred_check_branch
      %38 = sbr.rel (0) target = $region17
    $region16: #{tpu_custom_call.1} parent=1 // pred_region
      %s40 = ssub.s32 8192, 8192
      %41 = vsyncadd [#allocation6], %s40
      %s42 = sshll.u32 [#allocation7], 4
      %s43 = int_to_ptr.vmem [resolvable:$true] %s42
      %48 = dma.hbm_to_vmem [thread:$0]  %s3, 8192, %s43, [#allocation6], 128, 128, 8
    $region17: #{tpu_custom_call.1} parent=1 // pred_fallthru
      _
    // Predicated region
    $region18: #{tpu_custom_call.1} parent=1 // pred_check
      _
    $region19: #{tpu_custom_call.1} parent=1 // pred_check_branch
      %50 = sbr.rel (0) target = $region21
    $region20: #{tpu_custom_call.1} parent=1 // pred_region
      _
    $region21: #{tpu_custom_call.1} parent=1 // pred_fallthru
      _
    // Predicated region
    $region22: #{tpu_custom_call.1} parent=1 // pred_check
      _
    $region23: #{tpu_custom_call.1} parent=1 // pred_check_branch
      %52 = sbr.rel (0) target = $region25
    $region24: #{tpu_custom_call.1} parent=1 // pred_region
      %53 = dma.done [#allocation3], 64
    $region25: #{tpu_custom_call.1} parent=1 // pred_fallthru
      _
    // Predicated region
    $region26: #{tpu_custom_call.1} parent=1 // pred_check
      _
    $region27: #{tpu_custom_call.1} parent=1 // pred_check_branch
      %55 = sbr.rel (0) target = $region29
    $region28: #{tpu_custom_call.1} parent=1 // pred_region
      %56 = dma.done [#allocation6], 4096
    $region29: #{tpu_custom_call.1} parent=1 // pred_fallthru
      _
    // Predicated region
    $region30: #{tpu_custom_call.1} parent=1 // pred_check
      _
    $region31: #{tpu_custom_call.1} parent=1 // pred_check_branch
      %58 = sbr.rel (0) target = $region33
    $region32: #{tpu_custom_call.1} parent=1 // pred_region
      %59 = dma.done [#allocation6], 8192
    $region33: #{tpu_custom_call.1} parent=1 // pred_fallthru
      _
    %v61 = vld [vmem:[#allocation2] sm:$0xf]
    %v62 = vld [vmem:[#allocation5] sm:$0xff]
    %v63 = vld [vmem:[#allocation5 + $0x8] sm:$0xff]
    %v64 = vld [vmem:[#allocation5 + $0x10] sm:$0xff]
    %v65 = vld [vmem:[#allocation5 + $0x18] sm:$0xff]
    %v66 = vld [vmem:[#allocation5 + $0x20] sm:$0xff]
    %v67 = vld [vmem:[#allocation5 + $0x28] sm:$0xff]
    %v68 = vld [vmem:[#allocation5 + $0x30] sm:$0xff]
    %v69 = vld [vmem:[#allocation5 + $0x38] sm:$0xff]
    %v70 = vld [vmem:[#allocation5 + $0x40] sm:$0xff]
    %v71 = vld [vmem:[#allocation5 + $0x48] sm:$0xff]
    %v72 = vld [vmem:[#allocation5 + $0x50] sm:$0xff]
    %v73 = vld [vmem:[#allocation5 + $0x58] sm:$0xff]
    %v74 = vld [vmem:[#allocation5 + $0x60] sm:$0xff]
    %v75 = vld [vmem:[#allocation5 + $0x68] sm:$0xff]
    %v76 = vld [vmem:[#allocation5 + $0x70] sm:$0xff]
    %v77 = vld [vmem:[#allocation5 + $0x78] sm:$0xff]
    %v78 = vld [vmem:[#allocation5 + $0x80] sm:$0xff]
    %v79 = vld [vmem:[#allocation5 + $0x88] sm:$0xff]
    %v80 = vld [vmem:[#allocation5 + $0x90] sm:$0xff]
    %v81 = vld [vmem:[#allocation5 + $0x98] sm:$0xff]
    %v82 = vld [vmem:[#allocation5 + $0xa0] sm:$0xff]
    %v83 = vld [vmem:[#allocation5 + $0xa8] sm:$0xff]
    %v84 = vld [vmem:[#allocation5 + $0xb0] sm:$0xff]
    %v85 = vld [vmem:[#allocation5 + $0xb8] sm:$0xff]
    %v86 = vld [vmem:[#allocation5 + $0xc0] sm:$0xff]
    %v87 = vld [vmem:[#allocation5 + $0xc8] sm:$0xff]
    %v88 = vld [vmem:[#allocation5 + $0xd0] sm:$0xff]
    %v89 = vld [vmem:[#allocation5 + $0xd8] sm:$0xff]
    %v90 = vld [vmem:[#allocation5 + $0xe0] sm:$0xff]
    %v91 = vld [vmem:[#allocation5 + $0xe8] sm:$0xff]
    %v92 = vld [vmem:[#allocation5 + $0xf0] sm:$0xff]
    %v93 = vld [vmem:[#allocation5 + $0xf8] sm:$0xff]
    %v94 = vld [vmem:[%s2] sm:$0xf]
    %v96 = vlaneseq
    %v97 = vshrl.u32 %v96, 7
    %v98 = vsub.s32 0, %v97
    %v99 = vrot.slane %v94, %v98
    %v100 = vlaneseq
    %v101 = vshrl.u32 %v100, 7
    %v102 = vsub.s32 1, %v101
    %v103 = vrot.slane %v94, %v102
    %v104 = vlaneseq
    %v105 = vshrl.u32 %v104, 7
    %v106 = vsub.s32 2, %v105
    %v107 = vrot.slane %v94, %v106
    %v108 = vlaneseq
    %v109 = vshrl.u32 %v108, 7
    %v110 = vsub.s32 3, %v109
    %v111 = vrot.slane %v94, %v110
    %v148 = vunpack.c.l.b16 %v62
    %v149 = vunpack.c.h.b16 %v62
    %v150 = vunpack.c.l.b16 %v63
    %v151 = vunpack.c.h.b16 %v63
    %v152 = vunpack.c.l.b16 %v64
    %v153 = vunpack.c.h.b16 %v64
    %v154 = vunpack.c.l.b16 %v65
    %v155 = vunpack.c.h.b16 %v65
    %v156 = vunpack.c.l.b16 %v66
    %v157 = vunpack.c.h.b16 %v66
    %v158 = vunpack.c.l.b16 %v67
    %v159 = vunpack.c.h.b16 %v67
    %v160 = vunpack.c.l.b16 %v68
    %v161 = vunpack.c.h.b16 %v68
    %v162 = vunpack.c.l.b16 %v69
    %v163 = vunpack.c.h.b16 %v69
    %v164 = vunpack.c.l.b16 %v70
    %v165 = vunpack.c.h.b16 %v70
    %v166 = vunpack.c.l.b16 %v71
    %v167 = vunpack.c.h.b16 %v71
    %v168 = vunpack.c.l.b16 %v72
    %v169 = vunpack.c.h.b16 %v72
    %v170 = vunpack.c.l.b16 %v73
    %v171 = vunpack.c.h.b16 %v73
    %v172 = vunpack.c.l.b16 %v74
    %v173 = vunpack.c.h.b16 %v74
    %v174 = vunpack.c.l.b16 %v75
    %v175 = vunpack.c.h.b16 %v75
    %v176 = vunpack.c.l.b16 %v76
    %v177 = vunpack.c.h.b16 %v76
    %v178 = vunpack.c.l.b16 %v77
    %v179 = vunpack.c.h.b16 %v77
    %v180 = vunpack.c.l.b16 %v78
    %v181 = vunpack.c.h.b16 %v78
    %v182 = vunpack.c.l.b16 %v79
    %v183 = vunpack.c.h.b16 %v79
    %v184 = vunpack.c.l.b16 %v80
    %v185 = vunpack.c.h.b16 %v80
    %v186 = vunpack.c.l.b16 %v81
    %v187 = vunpack.c.h.b16 %v81
    %v188 = vunpack.c.l.b16 %v82
    %v189 = vunpack.c.h.b16 %v82
    %v190 = vunpack.c.l.b16 %v83
    %v191 = vunpack.c.h.b16 %v83
    %v192 = vunpack.c.l.b16 %v84
    %v193 = vunpack.c.h.b16 %v84
    %v194 = vunpack.c.l.b16 %v85
    %v195 = vunpack.c.h.b16 %v85
    %v196 = vunpack.c.l.b16 %v86
    %v197 = vunpack.c.h.b16 %v86
    %v198 = vunpack.c.l.b16 %v87
    %v199 = vunpack.c.h.b16 %v87
    %v200 = vunpack.c.l.b16 %v88
    %v201 = vunpack.c.h.b16 %v88
    %v202 = vunpack.c.l.b16 %v89
    %v203 = vunpack.c.h.b16 %v89
    %v204 = vunpack.c.l.b16 %v90
    %v205 = vunpack.c.h.b16 %v90
    %v206 = vunpack.c.l.b16 %v91
    %v207 = vunpack.c.h.b16 %v91
    %v208 = vunpack.c.l.b16 %v92
    %v209 = vunpack.c.h.b16 %v92
    %v210 = vunpack.c.l.b16 %v93
    %v211 = vunpack.c.h.b16 %v93
    %v212 = vpack.c.b16 %v152, %v148
    %v213 = vpack.c.b16 %v153, %v149
    %v214 = vpack.c.b16 %v154, %v150
    %v215 = vpack.c.b16 %v155, %v151
    %v216 = vpack.c.b16 %v160, %v156
    %v217 = vpack.c.b16 %v161, %v157
    %v218 = vpack.c.b16 %v162, %v158
    %v219 = vpack.c.b16 %v163, %v159
    %v220 = vpack.c.b16 %v168, %v164
    %v221 = vpack.c.b16 %v169, %v165
    %v222 = vpack.c.b16 %v170, %v166
    %v223 = vpack.c.b16 %v171, %v167
    %v224 = vpack.c.b16 %v176, %v172
    %v225 = vpack.c.b16 %v177, %v173
    %v226 = vpack.c.b16 %v178, %v174
    %v227 = vpack.c.b16 %v179, %v175
    %v228 = vpack.c.b16 %v184, %v180
    %v229 = vpack.c.b16 %v185, %v181
    %v230 = vpack.c.b16 %v186, %v182
    %v231 = vpack.c.b16 %v187, %v183
    %v232 = vpack.c.b16 %v192, %v188
    %v233 = vpack.c.b16 %v193, %v189
    %v234 = vpack.c.b16 %v194, %v190
    %v235 = vpack.c.b16 %v195, %v191
    %v236 = vpack.c.b16 %v200, %v196
    %v237 = vpack.c.b16 %v201, %v197
    %v238 = vpack.c.b16 %v202, %v198
    %v239 = vpack.c.b16 %v203, %v199
    %v240 = vpack.c.b16 %v208, %v204
    %v241 = vpack.c.b16 %v209, %v205
    %v242 = vpack.c.b16 %v210, %v206
    %v243 = vpack.c.b16 %v211, %v207
    %276 = vmatprep.subr.bf16.mxu0 %v213
    %277 = vmatpush1.bf16.msra.mxu0 %v212
    %278 = vmatprep.subr.bf16.mxu0 %v217
    %279 = vmatpush1.bf16.msra.mxu0 %v216
    %280 = vmatprep.subr.bf16.mxu0 %v221
    %281 = vmatpush1.bf16.msra.mxu0 %v220
    %282 = vmatprep.subr.bf16.mxu0 %v225
    %283 = vmatpush1.bf16.msra.mxu0 %v224
    %284 = vmatprep.subr.bf16.mxu0 %v229
    %285 = vmatpush1.bf16.msra.mxu0 %v228
    %286 = vmatprep.subr.bf16.mxu0 %v233
    %287 = vmatpush1.bf16.msra.mxu0 %v232
    %288 = vmatprep.subr.bf16.mxu0 %v237
    %289 = vmatpush1.bf16.msra.mxu0 %v236
    %290 = vmatprep.subr.bf16.mxu0 %v241
    %291 = vmatpush1.bf16.msra.mxu0 %v240
    %292 = vmatprep.subr.bf16.mxu0 0
    %293 = vmatpush1.bf16.msra.mxu0 0
    %294 = vmatprep.subr.bf16.mxu0 0
    %295 = vmatpush1.bf16.msra.mxu0 0
    %296 = vmatprep.subr.bf16.mxu0 0
    %297 = vmatpush1.bf16.msra.mxu0 0
    %298 = vmatprep.subr.bf16.mxu0 0
    %299 = vmatpush1.bf16.msra.mxu0 0
    %300 = vmatprep.subr.bf16.mxu0 0
    %301 = vmatpush1.bf16.msra.mxu0 0
    %302 = vmatprep.subr.bf16.mxu0 0
    %303 = vmatpush1.bf16.msra.mxu0 0
    %304 = vmatprep.subr.bf16.mxu0 0
    %305 = vmatpush1.bf16.msra.mxu0 0
    %306 = vmatprep.subr.bf16.mxu0 0
    %307 = vmatpush1.bf16.msra.mxu0 0
    %308 = vmatprep.mubr.bf16.mxu0 0
    %309 = vmatmul.mubr.bf16.gmra.mrb[0].mxu0 %v61
    %v310 = vpop.f32.mrb[0].mxu0
    %v311 = vadd.f32 %v99, %v310
    %v312 = vpop.f32.mrb[0].mxu0
    %v313 = vadd.f32 %v103, %v312
    %v314 = vpop.f32.mrb[0].mxu0
    %v315 = vpop.f32.mrb[0].mxu0
    %316 = vdwg.mxu0
    %317 = vmatprep.subr.bf16.mxu0 %v215
    %318 = vmatpush1.bf16.msra.mxu0 %v214
    %319 = vmatprep.subr.bf16.mxu0 %v219
    %320 = vmatpush1.bf16.msra.mxu0 %v218
    %321 = vmatprep.subr.bf16.mxu0 %v223
    %322 = vmatpush1.bf16.msra.mxu0 %v222
    %323 = vmatprep.subr.bf16.mxu0 %v227
    %324 = vmatpush1.bf16.msra.mxu0 %v226
    %325 = vmatprep.subr.bf16.mxu0 %v231
    %326 = vmatpush1.bf16.msra.mxu0 %v230
    %327 = vmatprep.subr.bf16.mxu0 %v235
    %328 = vmatpush1.bf16.msra.mxu0 %v234
    %329 = vmatprep.subr.bf16.mxu0 %v239
    %330 = vmatpush1.bf16.msra.mxu0 %v238
    %331 = vmatprep.subr.bf16.mxu0 %v243
    %332 = vmatpush1.bf16.msra.mxu0 %v242
    %333 = vmatprep.subr.bf16.mxu0 0
    %334 = vmatpush1.bf16.msra.mxu0 0
    %335 = vmatprep.subr.bf16.mxu0 0
    %336 = vmatpush1.bf16.msra.mxu0 0
    %337 = vmatprep.subr.bf16.mxu0 0
    %338 = vmatpush1.bf16.msra.mxu0 0
    %339 = vmatprep.subr.bf16.mxu0 0
    %340 = vmatpush1.bf16.msra.mxu0 0
    %341 = vmatprep.subr.bf16.mxu0 0
    %342 = vmatpush1.bf16.msra.mxu0 0
    %343 = vmatprep.subr.bf16.mxu0 0
    %344 = vmatpush1.bf16.msra.mxu0 0
    %345 = vmatprep.subr.bf16.mxu0 0
    %346 = vmatpush1.bf16.msra.mxu0 0
    %347 = vmatprep.subr.bf16.mxu0 0
    %348 = vmatpush1.bf16.msra.mxu0 0
    %349 = vmatprep.mubr.bf16.mxu0 0
    %350 = vmatmul.mubr.bf16.gmra.mrb[0].mxu0 %v61
    %v351 = vpop.f32.mrb[0].mxu0
    %v352 = vadd.f32 %v107, %v351
    %v353 = vpop.f32.mrb[0].mxu0
    %v354 = vadd.f32 %v111, %v353
    %v355 = vpop.f32.mrb[0].mxu0
    %v356 = vpop.f32.mrb[0].mxu0
    %357 = vdwg.mxu0
    %v358 = vmax.f32 %v311, 0.0
    %v359 = vmax.f32 %v313, 0.0
    %v360 = vmax.f32 %v352, 0.0
    %v361 = vmax.f32 %v354, 0.0
    %v362 = vpack.c.bf16 %v358, %v358
    %v363 = vpack.c.bf16 %v359, %v359
    %v364 = vpack.c.bf16 %v360, %v360
    %v365 = vpack.c.bf16 %v361, %v361
    %v366 = vld [vmem:[#allocation7] sm:$0xff]
    %v367 = vld [vmem:[#allocation7 + $0x8] sm:$0xff]
    %v368 = vld [vmem:[#allocation7 + $0x10] sm:$0xff]
    %v369 = vld [vmem:[#allocation7 + $0x18] sm:$0xff]
    %v370 = vld [vmem:[#allocation7 + $0x20] sm:$0xff]
    %v371 = vld [vmem:[#allocation7 + $0x28] sm:$0xff]
    %v372 = vld [vmem:[#allocation7 + $0x30] sm:$0xff]
    %v373 = vld [vmem:[#allocation7 + $0x38] sm:$0xff]
    %v374 = vld [vmem:[#allocation7 + $0x40] sm:$0xff]
    %v375 = vld [vmem:[#allocation7 + $0x48] sm:$0xff]
    %v376 = vld [vmem:[#allocation7 + $0x50] sm:$0xff]
    %v377 = vld [vmem:[#allocation7 + $0x58] sm:$0xff]
    %v378 = vld [vmem:[#allocation7 + $0x60] sm:$0xff]
    %v379 = vld [vmem:[#allocation7 + $0x68] sm:$0xff]
    %v380 = vld [vmem:[#allocation7 + $0x70] sm:$0xff]
    %v381 = vld [vmem:[#allocation7 + $0x78] sm:$0xff]
    %v382 = vld [vmem:[#allocation7 + $0x80] sm:$0xff]
    %v383 = vld [vmem:[#allocation7 + $0x88] sm:$0xff]
    %v384 = vld [vmem:[#allocation7 + $0x90] sm:$0xff]
    %v385 = vld [vmem:[#allocation7 + $0x98] sm:$0xff]
    %v386 = vld [vmem:[#allocation7 + $0xa0] sm:$0xff]
    %v387 = vld [vmem:[#allocation7 + $0xa8] sm:$0xff]
    %v388 = vld [vmem:[#allocation7 + $0xb0] sm:$0xff]
    %v389 = vld [vmem:[#allocation7 + $0xb8] sm:$0xff]
    %v390 = vld [vmem:[#allocation7 + $0xc0] sm:$0xff]
    %v391 = vld [vmem:[#allocation7 + $0xc8] sm:$0xff]
    %v392 = vld [vmem:[#allocation7 + $0xd0] sm:$0xff]
    %v393 = vld [vmem:[#allocation7 + $0xd8] sm:$0xff]
    %v394 = vld [vmem:[#allocation7 + $0xe0] sm:$0xff]
    %v395 = vld [vmem:[#allocation7 + $0xe8] sm:$0xff]
    %v396 = vld [vmem:[#allocation7 + $0xf0] sm:$0xff]
    %v397 = vld [vmem:[#allocation7 + $0xf8] sm:$0xff]
    %v398 = vld [vmem:[#allocation7 + $0x100] sm:$0xff]
    %v399 = vld [vmem:[#allocation7 + $0x108] sm:$0xff]
    %v400 = vld [vmem:[#allocation7 + $0x110] sm:$0xff]
    %v401 = vld [vmem:[#allocation7 + $0x118] sm:$0xff]
    %v402 = vld [vmem:[#allocation7 + $0x120] sm:$0xff]
    %v403 = vld [vmem:[#allocation7 + $0x128] sm:$0xff]
    %v404 = vld [vmem:[#allocation7 + $0x130] sm:$0xff]
    %v405 = vld [vmem:[#allocation7 + $0x138] sm:$0xff]
    %v406 = vld [vmem:[#allocation7 + $0x140] sm:$0xff]
    %v407 = vld [vmem:[#allocation7 + $0x148] sm:$0xff]
    %v408 = vld [vmem:[#allocation7 + $0x150] sm:$0xff]
    %v409 = vld [vmem:[#allocation7 + $0x158] sm:$0xff]
    %v410 = vld [vmem:[#allocation7 + $0x160] sm:$0xff]
    %v411 = vld [vmem:[#allocation7 + $0x168] sm:$0xff]
    %v412 = vld [vmem:[#allocation7 + $0x170] sm:$0xff]
    %v413 = vld [vmem:[#allocation7 + $0x178] sm:$0xff]
    %v414 = vld [vmem:[#allocation7 + $0x180] sm:$0xff]
    %v415 = vld [vmem:[#allocation7 + $0x188] sm:$0xff]
    %v416 = vld [vmem:[#allocation7 + $0x190] sm:$0xff]
    %v417 = vld [vmem:[#allocation7 + $0x198] sm:$0xff]
    %v418 = vld [vmem:[#allocation7 + $0x1a0] sm:$0xff]
    %v419 = vld [vmem:[#allocation7 + $0x1a8] sm:$0xff]
    %v420 = vld [vmem:[#allocation7 + $0x1b0] sm:$0xff]
    %v421 = vld [vmem:[#allocation7 + $0x1b8] sm:$0xff]
    %v422 = vld [vmem:[#allocation7 + $0x1c0] sm:$0xff]
    %v423 = vld [vmem:[#allocation7 + $0x1c8] sm:$0xff]
    %v424 = vld [vmem:[#allocation7 + $0x1d0] sm:$0xff]
    %v425 = vld [vmem:[#allocation7 + $0x1d8] sm:$0xff]
    %v426 = vld [vmem:[#allocation7 + $0x1e0] sm:$0xff]
    %v427 = vld [vmem:[#allocation7 + $0x1e8] sm:$0xff]
    %v428 = vld [vmem:[#allocation7 + $0x1f0] sm:$0xff]
    %v429 = vld [vmem:[#allocation7 + $0x1f8] sm:$0xff]
    %v430 = vld [vmem:[%s4] sm:$0x3]
    %v432 = vlaneseq
    %v433 = vshrl.u32 %v432, 7
    %v434 = vsub.s32 0, %v433
    %v435 = vrot.slane %v430, %v434
    %v436 = vlaneseq
    %v437 = vshrl.u32 %v436, 7
    %v438 = vsub.s32 1, %v437
    %v439 = vrot.slane %v430, %v438
    %v506 = vunpack.c.l.b16 %v366
    %v507 = vunpack.c.h.b16 %v366
    %v508 = vunpack.c.l.b16 %v367
    %v509 = vunpack.c.h.b16 %v367
    %v510 = vunpack.c.l.b16 %v368
    %v511 = vunpack.c.h.b16 %v368
    %v512 = vunpack.c.l.b16 %v369
    %v513 = vunpack.c.h.b16 %v369
    %v514 = vunpack.c.l.b16 %v370
    %v515 = vunpack.c.h.b16 %v370
    %v516 = vunpack.c.l.b16 %v371
    %v517 = vunpack.c.h.b16 %v371
    %v518 = vunpack.c.l.b16 %v372
    %v519 = vunpack.c.h.b16 %v372
    %v520 = vunpack.c.l.b16 %v373
    %v521 = vunpack.c.h.b16 %v373
    %v522 = vunpack.c.l.b16 %v374
    %v523 = vunpack.c.h.b16 %v374
    %v524 = vunpack.c.l.b16 %v375
    %v525 = vunpack.c.h.b16 %v375
    %v526 = vunpack.c.l.b16 %v376
    %v527 = vunpack.c.h.b16 %v376
    %v528 = vunpack.c.l.b16 %v377
    %v529 = vunpack.c.h.b16 %v377
    %v530 = vunpack.c.l.b16 %v378
    %v531 = vunpack.c.h.b16 %v378
    %v532 = vunpack.c.l.b16 %v379
    %v533 = vunpack.c.h.b16 %v379
    %v534 = vunpack.c.l.b16 %v380
    %v535 = vunpack.c.h.b16 %v380
    %v536 = vunpack.c.l.b16 %v381
    %v537 = vunpack.c.h.b16 %v381
    %v538 = vunpack.c.l.b16 %v382
    %v539 = vunpack.c.h.b16 %v382
    %v540 = vunpack.c.l.b16 %v383
    %v541 = vunpack.c.h.b16 %v383
    %v542 = vunpack.c.l.b16 %v384
    %v543 = vunpack.c.h.b16 %v384
    %v544 = vunpack.c.l.b16 %v385
    %v545 = vunpack.c.h.b16 %v385
    %v546 = vunpack.c.l.b16 %v386
    %v547 = vunpack.c.h.b16 %v386
    %v548 = vunpack.c.l.b16 %v387
    %v549 = vunpack.c.h.b16 %v387
    %v550 = vunpack.c.l.b16 %v388
    %v551 = vunpack.c.h.b16 %v388
    %v552 = vunpack.c.l.b16 %v389
    %v553 = vunpack.c.h.b16 %v389
    %v554 = vunpack.c.l.b16 %v390
    %v555 = vunpack.c.h.b16 %v390
    %v556 = vunpack.c.l.b16 %v391
    %v557 = vunpack.c.h.b16 %v391
    %v558 = vunpack.c.l.b16 %v392
    %v559 = vunpack.c.h.b16 %v392
    %v560 = vunpack.c.l.b16 %v393
    %v561 = vunpack.c.h.b16 %v393
    %v562 = vunpack.c.l.b16 %v394
    %v563 = vunpack.c.h.b16 %v394
    %v564 = vunpack.c.l.b16 %v395
    %v565 = vunpack.c.h.b16 %v395
    %v566 = vunpack.c.l.b16 %v396
    %v567 = vunpack.c.h.b16 %v396
    %v568 = vunpack.c.l.b16 %v397
    %v569 = vunpack.c.h.b16 %v397
    %v570 = vunpack.c.l.b16 %v398
    %v571 = vunpack.c.h.b16 %v398
    %v572 = vunpack.c.l.b16 %v399
    %v573 = vunpack.c.h.b16 %v399
    %v574 = vunpack.c.l.b16 %v400
    %v575 = vunpack.c.h.b16 %v400
    %v576 = vunpack.c.l.b16 %v401
    %v577 = vunpack.c.h.b16 %v401
    %v578 = vunpack.c.l.b16 %v402
    %v579 = vunpack.c.h.b16 %v402
    %v580 = vunpack.c.l.b16 %v403
    %v581 = vunpack.c.h.b16 %v403
    %v582 = vunpack.c.l.b16 %v404
    %v583 = vunpack.c.h.b16 %v404
    %v584 = vunpack.c.l.b16 %v405
    %v585 = vunpack.c.h.b16 %v405
    %v586 = vunpack.c.l.b16 %v406
    %v587 = vunpack.c.h.b16 %v406
    %v588 = vunpack.c.l.b16 %v407
    %v589 = vunpack.c.h.b16 %v407
    %v590 = vunpack.c.l.b16 %v408
    %v591 = vunpack.c.h.b16 %v408
    %v592 = vunpack.c.l.b16 %v409
    %v593 = vunpack.c.h.b16 %v409
    %v594 = vunpack.c.l.b16 %v410
    %v595 = vunpack.c.h.b16 %v410
    %v596 = vunpack.c.l.b16 %v411
    %v597 = vunpack.c.h.b16 %v411
    %v598 = vunpack.c.l.b16 %v412
    %v599 = vunpack.c.h.b16 %v412
    %v600 = vunpack.c.l.b16 %v413
    %v601 = vunpack.c.h.b16 %v413
    %v602 = vunpack.c.l.b16 %v414
    %v603 = vunpack.c.h.b16 %v414
    %v604 = vunpack.c.l.b16 %v415
    %v605 = vunpack.c.h.b16 %v415
    %v606 = vunpack.c.l.b16 %v416
    %v607 = vunpack.c.h.b16 %v416
    %v608 = vunpack.c.l.b16 %v417
    %v609 = vunpack.c.h.b16 %v417
    %v610 = vunpack.c.l.b16 %v418
    %v611 = vunpack.c.h.b16 %v418
    %v612 = vunpack.c.l.b16 %v419
    %v613 = vunpack.c.h.b16 %v419
    %v614 = vunpack.c.l.b16 %v420
    %v615 = vunpack.c.h.b16 %v420
    %v616 = vunpack.c.l.b16 %v421
    %v617 = vunpack.c.h.b16 %v421
    %v618 = vunpack.c.l.b16 %v422
    %v619 = vunpack.c.h.b16 %v422
    %v620 = vunpack.c.l.b16 %v423
    %v621 = vunpack.c.h.b16 %v423
    %v622 = vunpack.c.l.b16 %v424
    %v623 = vunpack.c.h.b16 %v424
    %v624 = vunpack.c.l.b16 %v425
    %v625 = vunpack.c.h.b16 %v425
    %v626 = vunpack.c.l.b16 %v426
    %v627 = vunpack.c.h.b16 %v426
    %v628 = vunpack.c.l.b16 %v427
    %v629 = vunpack.c.h.b16 %v427
    %v630 = vunpack.c.l.b16 %v428
    %v631 = vunpack.c.h.b16 %v428
    %v632 = vunpack.c.l.b16 %v429
    %v633 = vunpack.c.h.b16 %v429
    %v634 = vpack.c.b16 %v508, %v506
    %v635 = vpack.c.b16 %v509, %v507
    %v636 = vpack.c.b16 %v512, %v510
    %v637 = vpack.c.b16 %v513, %v511
    %v638 = vpack.c.b16 %v516, %v514
    %v639 = vpack.c.b16 %v517, %v515
    %v640 = vpack.c.b16 %v520, %v518
    %v641 = vpack.c.b16 %v521, %v519
    %v642 = vpack.c.b16 %v524, %v522
    %v643 = vpack.c.b16 %v525, %v523
    %v644 = vpack.c.b16 %v528, %v526
    %v645 = vpack.c.b16 %v529, %v527
    %v646 = vpack.c.b16 %v532, %v530
    %v647 = vpack.c.b16 %v533, %v531
    %v648 = vpack.c.b16 %v536, %v534
    %v649 = vpack.c.b16 %v537, %v535
    %v650 = vpack.c.b16 %v540, %v538
    %v651 = vpack.c.b16 %v541, %v539
    %v652 = vpack.c.b16 %v544, %v542
    %v653 = vpack.c.b16 %v545, %v543
    %v654 = vpack.c.b16 %v548, %v546
    %v655 = vpack.c.b16 %v549, %v547
    %v656 = vpack.c.b16 %v552, %v550
    %v657 = vpack.c.b16 %v553, %v551
    %v658 = vpack.c.b16 %v556, %v554
    %v659 = vpack.c.b16 %v557, %v555
    %v660 = vpack.c.b16 %v560, %v558
    %v661 = vpack.c.b16 %v561, %v559
    %v662 = vpack.c.b16 %v564, %v562
    %v663 = vpack.c.b16 %v565, %v563
    %v664 = vpack.c.b16 %v568, %v566
    %v665 = vpack.c.b16 %v569, %v567
    %v666 = vpack.c.b16 %v572, %v570
    %v667 = vpack.c.b16 %v573, %v571
    %v668 = vpack.c.b16 %v576, %v574
    %v669 = vpack.c.b16 %v577, %v575
    %v670 = vpack.c.b16 %v580, %v578
    %v671 = vpack.c.b16 %v581, %v579
    %v672 = vpack.c.b16 %v584, %v582
    %v673 = vpack.c.b16 %v585, %v583
    %v674 = vpack.c.b16 %v588, %v586
    %v675 = vpack.c.b16 %v589, %v587
    %v676 = vpack.c.b16 %v592, %v590
    %v677 = vpack.c.b16 %v593, %v591
    %v678 = vpack.c.b16 %v596, %v594
    %v679 = vpack.c.b16 %v597, %v595
    %v680 = vpack.c.b16 %v600, %v598
    %v681 = vpack.c.b16 %v601, %v599
    %v682 = vpack.c.b16 %v604, %v602
    %v683 = vpack.c.b16 %v605, %v603
    %v684 = vpack.c.b16 %v608, %v606
    %v685 = vpack.c.b16 %v609, %v607
    %v686 = vpack.c.b16 %v612, %v610
    %v687 = vpack.c.b16 %v613, %v611
    %v688 = vpack.c.b16 %v616, %v614
    %v689 = vpack.c.b16 %v617, %v615
    %v690 = vpack.c.b16 %v620, %v618
    %v691 = vpack.c.b16 %v621, %v619
    %v692 = vpack.c.b16 %v624, %v622
    %v693 = vpack.c.b16 %v625, %v623
    %v694 = vpack.c.b16 %v628, %v626
    %v695 = vpack.c.b16 %v629, %v627
    %v696 = vpack.c.b16 %v632, %v630
    %v697 = vpack.c.b16 %v633, %v631
    %762 = vmatprep.subr.bf16.mxu0 %v635
    %763 = vmatpush1.bf16.msra.mxu0 %v634
    %764 = vmatprep.subr.bf16.mxu0 %v637
    %765 = vmatpush1.bf16.msra.mxu0 %v636
    %766 = vmatprep.subr.bf16.mxu0 %v639
    %767 = vmatpush1.bf16.msra.mxu0 %v638
    %768 = vmatprep.subr.bf16.mxu0 %v641
    %769 = vmatpush1.bf16.msra.mxu0 %v640
    %770 = vmatprep.subr.bf16.mxu0 %v643
    %771 = vmatpush1.bf16.msra.mxu0 %v642
    %772 = vmatprep.subr.bf16.mxu0 %v645
    %773 = vmatpush1.bf16.msra.mxu0 %v644
    %774 = vmatprep.subr.bf16.mxu0 %v647
    %775 = vmatpush1.bf16.msra.mxu0 %v646
    %776 = vmatprep.subr.bf16.mxu0 %v649
    %777 = vmatpush1.bf16.msra.mxu0 %v648
    %778 = vmatprep.subr.bf16.mxu0 %v651
    %779 = vmatpush1.bf16.msra.mxu0 %v650
    %780 = vmatprep.subr.bf16.mxu0 %v653
    %781 = vmatpush1.bf16.msra.mxu0 %v652
    %782 = vmatprep.subr.bf16.mxu0 %v655
    %783 = vmatpush1.bf16.msra.mxu0 %v654
    %784 = vmatprep.subr.bf16.mxu0 %v657
    %785 = vmatpush1.bf16.msra.mxu0 %v656
    %786 = vmatprep.subr.bf16.mxu0 %v659
    %787 = vmatpush1.bf16.msra.mxu0 %v658
    %788 = vmatprep.subr.bf16.mxu0 %v661
    %789 = vmatpush1.bf16.msra.mxu0 %v660
    %790 = vmatprep.subr.bf16.mxu0 %v663
    %791 = vmatpush1.bf16.msra.mxu0 %v662
    %792 = vmatprep.subr.bf16.mxu0 %v665
    %793 = vmatpush1.bf16.msra.mxu0 %v664
    %794 = vmatprep.mubr.bf16.mxu0 %v363
    %795 = vmatmul.mubr.bf16.gmra.mrb[0].mxu0 %v362
    %v796 = vpop.f32.mrb[0].mxu0
    %v797 = vadd.f32 %v435, %v796
    %v798 = vpop.f32.mrb[0].mxu0
    %v799 = vadd.f32 %v439, %v798
    %v800 = vpop.f32.mrb[0].mxu0
    %v801 = vpop.f32.mrb[0].mxu0
    %802 = vdwg.mxu0
    %803 = vmatprep.subr.bf16.mxu0 %v667
    %804 = vmatpush1.bf16.msra.mxu0 %v666
    %805 = vmatprep.subr.bf16.mxu0 %v669
    %806 = vmatpush1.bf16.msra.mxu0 %v668
    %807 = vmatprep.subr.bf16.mxu0 %v671
    %808 = vmatpush1.bf16.msra.mxu0 %v670
    %809 = vmatprep.subr.bf16.mxu0 %v673
    %810 = vmatpush1.bf16.msra.mxu0 %v672
    %811 = vmatprep.subr.bf16.mxu0 %v675
    %812 = vmatpush1.bf16.msra.mxu0 %v674
    %813 = vmatprep.subr.bf16.mxu0 %v677
    %814 = vmatpush1.bf16.msra.mxu0 %v676
    %815 = vmatprep.subr.bf16.mxu0 %v679
    %816 = vmatpush1.bf16.msra.mxu0 %v678
    %817 = vmatprep.subr.bf16.mxu0 %v681
    %818 = vmatpush1.bf16.msra.mxu0 %v680
    %819 = vmatprep.subr.bf16.mxu0 %v683
    %820 = vmatpush1.bf16.msra.mxu0 %v682
    %821 = vmatprep.subr.bf16.mxu0 %v685
    %822 = vmatpush1.bf16.msra.mxu0 %v684
    %823 = vmatprep.subr.bf16.mxu0 %v687
    %824 = vmatpush1.bf16.msra.mxu0 %v686
    %825 = vmatprep.subr.bf16.mxu0 %v689
    %826 = vmatpush1.bf16.msra.mxu0 %v688
    %827 = vmatprep.subr.bf16.mxu0 %v691
    %828 = vmatpush1.bf16.msra.mxu0 %v690
    %829 = vmatprep.subr.bf16.mxu0 %v693
    %830 = vmatpush1.bf16.msra.mxu0 %v692
    %831 = vmatprep.subr.bf16.mxu0 %v695
    %832 = vmatpush1.bf16.msra.mxu0 %v694
    %833 = vmatprep.subr.bf16.mxu0 %v697
    %834 = vmatpush1.bf16.msra.mxu0 %v696
    %835 = vmatprep.mubr.bf16.mxu0 %v365
    %836 = vmatmul.mubr.bf16.gmra.mrb[0].mxu0 %v364
    %v837 = vpop.f32.mrb[0].mxu0
    %v838 = vadd.f32 %v797, %v837
    %v839 = vpop.f32.mrb[0].mxu0
    %v840 = vadd.f32 %v799, %v839
    %v841 = vpop.f32.mrb[0].mxu0
    %v842 = vpop.f32.mrb[0].mxu0
    %843 = vdwg.mxu0
    %844 = vst [vmem:[#allocation8] sm:$0xff] %v838
    %845 = vst [vmem:[#allocation8 + $0x8] sm:$0xff] %v840
    // Predicated region
    $region34: #{tpu_custom_call.1} parent=1 // pred_check
      _
    $region35: #{tpu_custom_call.1} parent=1 // pred_check_branch
      %847 = sbr.rel (0) target = $region37
    $region36: #{tpu_custom_call.1} parent=1 // pred_region
      %s849 = ssub.s32 256, 256
      %850 = vsyncadd [#allocation4], %s849
      %s852 = sshll.u32 [#allocation8], 4
      %s853 = int_to_ptr.vmem [resolvable:$true] %s852
      %855 = dma.vmem_to_hbm [thread:$0]  %s853, 256, %s5, [#allocation4]
    $region37: #{tpu_custom_call.1} parent=1 // pred_fallthru
      _
    // Predicated region
    $region38: #{tpu_custom_call.1} parent=1 // pred_check
      _
    $region39: #{tpu_custom_call.1} parent=1 // pred_check_branch
      %857 = sbr.rel (0) target = $region41
    $region40: #{tpu_custom_call.1} parent=1 // pred_region
      %858 = dma.done [#allocation4], 256
    $region41: #{tpu_custom_call.1} parent=1 // pred_fallthru
      _
    %859 = vsyncpa [#allocation3], 1
    %860 = vsyncpa [#allocation6], 1
    %861 = vsyncpa [#allocation4], 1

</llo_original>
